<compile_context>
chip_gen: v7x
topology: tpu7x:2x2x1
jax: 0.10.0
libtpu: 0.0.40
codegen_flags: <defaults>
</compile_context>

<pallas_src>
import jax
import jax.numpy as jnp
from jax import lax
from jax.experimental import pallas as pl
from jax.experimental.pallas import tpu as pltpu

EPS = 1e-8


def visual_conv1d_kernel(x_ref, w1_ref, w2_ref, hp_ref, vp_ref, alpha_ref, o_ref):
    x = x_ref[0]                                   # (V, K) f32
    V, K = x.shape
    H = hp_ref.shape[0]

    # Packed per-channel parameters.
    hp = hp_ref[...]                               # (H, 8) f32
    bias1 = hp[:, 0:1]                             # W1 @ beta0
    g1 = hp[:, 1:2]
    b1 = hp[:, 2:3]
    wd_p = hp[:, 3:4]                              # depthwise taps (prev, center, next)
    wd_c = hp[:, 4:5]
    wd_n = hp[:, 5:6]
    w1_rowsum = hp[:, 6:7]                         # sum_V of folded conv1x1 weight
    vp = vp_ref[...]                               # (V, 8) f32
    bias2 = vp[:, 0:1]                             # W2 @ beta2
    w2_rowsum = vp[:, 1:2]                         # sum_H of folded pw_conv weight

    ones_k = jnp.ones((K, 1), jnp.float32)         # MXU lane-reduction column

    # ---- relu_0 + gLN(V) statistics (lane reduction on MXU, f32 accumulation) ----
    a = jnp.maximum(x, 0.0)
    inv_n0 = 1.0 / (V * K)
    sum0 = jnp.sum(jnp.dot(a, ones_k, preferred_element_type=jnp.float32))
    sumsq0 = jnp.sum(jnp.dot(a * a, ones_k, preferred_element_type=jnp.float32))
    mean0 = sum0 * inv_n0
    var0 = jnp.maximum(sumsq0 * inv_n0 - mean0 * mean0, 0.0)
    std0 = jnp.sqrt(var0 + EPS)

    # ---- conv1x1 (V -> H, no bias), gamma0/beta0 folded into w1/bias1. ----
    # True activation would be b_true = (W1f @ (a - mean0)) / std0 + bias1.  relu followed by
    # gLN(H) is invariant to the positive scale 1/std0, so compute b = b_true * std0 instead:
    #   b = W1f @ a - w1_rowsum*mean0 + bias1*std0   (mean0-centering folded into the epilogue)
    b = jnp.dot(w1_ref[...], a.astype(jnp.bfloat16),
                preferred_element_type=jnp.float32)            # (H, K) f32
    b = b + (bias1 * std0 - w1_rowsum * mean0)                 # single (H,1)-broadcast pass

    # ---- relu + gLN(H) (scale-invariant, so stats on the std0-scaled activation are fine) ----
    r = jnp.maximum(b, 0.0)
    inv_n1 = 1.0 / (H * K)
    sum1 = jnp.sum(jnp.dot(r, ones_k, preferred_element_type=jnp.float32))
    sumsq1 = jnp.sum(jnp.dot(r * r, ones_k, preferred_element_type=jnp.float32))
    mean1 = sum1 * inv_n1
    var1 = jnp.maximum(sumsq1 * inv_n1 - mean1 * mean1, 0.0)
    inv1 = lax.rsqrt(var1 + EPS)
    scale1 = g1 * inv1                             # (H, 1)
    offset1 = b1 - scale1 * mean1                  # (H, 1)
    bn = r * scale1 + offset1                      # mul-add only (no separate centering pass)

    # ---- depthwise conv: kernel=3, stride=1, padding=1, groups=H, no bias ----
    # roll (XLU) + (1,K) 0/1 boundary masks applied by multiply.
    lane = lax.broadcasted_iota(jnp.int32, (1, K), 1)
    mask_first = (lane > 0).astype(jnp.float32)            # zero at t == 0
    mask_last = (lane < K - 1).astype(jnp.float32)         # zero at t == K-1
    b_prev = pltpu.roll(bn, shift=1, axis=1) * mask_first      # out[t] = bn[t-1]
    b_next = pltpu.roll(bn, shift=K - 1, axis=1) * mask_last   # out[t] = bn[t+1]
    c = wd_c * bn + wd_p * b_prev + wd_n * b_next

    # ---- PReLU (single shared parameter, read from SMEM) ----
    alpha = alpha_ref[0]
    c = jnp.where(c > 0, c, alpha * c)

    # ---- gLN(H) stats only; gamma2/beta2 folded into w2/bias2, mean2 folded into epilogue ----
    sum2 = jnp.sum(jnp.dot(c, ones_k, preferred_element_type=jnp.float32))
    sumsq2 = jnp.sum(jnp.dot(c * c, ones_k, preferred_element_type=jnp.float32))
    mean2 = sum2 * inv_n1
    var2 = jnp.maximum(sumsq2 * inv_n1 - mean2 * mean2, 0.0)
    inv2 = lax.rsqrt(var2 + EPS)

    # ---- pw_conv (H -> V, no bias) + residual ----
    d = jnp.dot(w2_ref[...], c.astype(jnp.bfloat16),
                preferred_element_type=jnp.float32)            # (V, K) f32
    o_ref[0] = d * inv2 + (bias2 - w2_rowsum * (mean2 * inv2)) + x


def visual_conv1d(x, w1, wds, w2, g0, b0, g1, b1, g2, b2, alpha):
    M, V, K = x.shape
    H = w1.shape[0]

    # Fold the per-channel gLN affine that feeds each 1x1 conv into the conv weights
    # (identity for default gamma=1, beta=0):
    #   W @ (g*cent/std + beta) == ((W*g^T) @ cent) / std + W @ beta
    w1f = (w1 * g0.T).astype(jnp.bfloat16)                     # (H, V) bf16
    bias1 = w1 @ b0                                            # (H, 1) f32
    w1_rowsum = jnp.sum(w1f.astype(jnp.float32), axis=1, keepdims=True)
    w2f = (w2 * g2.T).astype(jnp.bfloat16)                     # (V, H) bf16
    bias2 = w2 @ b2                                            # (V, 1) f32
    w2_rowsum = jnp.sum(w2f.astype(jnp.float32), axis=1, keepdims=True)

    # Pack the small per-channel params into single lane-padded blocks.
    hp = jnp.concatenate(
        [bias1, g1, b1, wds[:, 0:1], wds[:, 1:2], wds[:, 2:3], w1_rowsum,
         jnp.zeros((H, 1), jnp.float32)], axis=1).astype(jnp.float32)      # (H, 8)
    vp = jnp.concatenate(
        [bias2, w2_rowsum, jnp.zeros((V, 6), jnp.float32)], axis=1).astype(jnp.float32)  # (V, 8)
    alpha1 = jnp.reshape(alpha, (1,)).astype(jnp.float32)

    # Generation-adaptive VMEM budget: ~75% of physical VMEM (96 MiB on v5e/v6e, 48 MiB on v7x).
    try:
        info = pltpu.get_tpu_info()
        vmem_cap = int(getattr(info, "vmem_capacity_bytes", 0)) or 128 * 1024 * 1024
    except Exception:
        vmem_cap = 128 * 1024 * 1024
    vmem_limit = int(0.75 * vmem_cap)

    def const(shape):
        return pl.BlockSpec(shape, lambda m: (0,) * len(shape))

    return pl.pallas_call(
        visual_conv1d_kernel,
        out_shape=jax.ShapeDtypeStruct((M, V, K), x.dtype),
        grid=(M,),
        in_specs=[
            pl.BlockSpec((1, V, K), lambda m: (m, 0, 0)),       # x
            const((H, V)),                                      # folded conv1x1 weight (bf16)
            const((V, H)),                                      # folded pw_conv weight (bf16)
            const((H, 8)),                                      # packed H-side params
            const((V, 8)),                                      # packed V-side params
            pl.BlockSpec(memory_space=pltpu.MemorySpace.SMEM),  # prelu alpha (scalar)
        ],
        out_specs=pl.BlockSpec((1, V, K), lambda m: (m, 0, 0)),
        compiler_params=pltpu.CompilerParams(
            dimension_semantics=("parallel",),                  # keep batch megacore-sharded
            vmem_limit_bytes=vmem_limit),
    )(x, w1f, w2f, hp, vp, alpha1)


def init_params(key, V, H):
    k1, k2, k3 = jax.random.split(key, 3)
    # PyTorch Conv1d default init: U(-1/sqrt(fan_in), 1/sqrt(fan_in))
    bound1 = 1.0 / jnp.sqrt(V * 1.0)          # conv1x1: fan_in = V * 1
    w1 = jax.random.uniform(k1, (H, V), jnp.float32, -bound1, bound1)
    bound_ds = 1.0 / jnp.sqrt(3.0)            # dsconv: fan_in = (H/groups) * 3 = 3
    wds = jax.random.uniform(k2, (H, 3), jnp.float32, -bound_ds, bound_ds)
    bound2 = 1.0 / jnp.sqrt(H * 1.0)          # pw_conv: fan_in = H * 1
    w2 = jax.random.uniform(k3, (V, H), jnp.float32, -bound2, bound2)
    # gLN params: gamma=1, beta=0 (as in reset_parameters)
    g0, b0 = jnp.ones((V, 1), jnp.float32), jnp.zeros((V, 1), jnp.float32)
    g1, b1 = jnp.ones((H, 1), jnp.float32), jnp.zeros((H, 1), jnp.float32)
    g2, b2 = jnp.ones((H, 1), jnp.float32), jnp.zeros((H, 1), jnp.float32)
    alpha = jnp.full((1,), 0.25, jnp.float32)   # PReLU default init
    return w1, wds, w2, g0, b0, g1, b1, g2, b2, alpha


if __name__ == "__main__":
    # Small shapes consistent with the module (V=256, H=512 by default; scaled down).
    M, V, H, K = 2, 16, 32, 128
    key = jax.random.PRNGKey(0)
    kx, kp = jax.random.split(key)
    x = jax.random.normal(kx, (M, V, K), dtype=jnp.float32)
    params = init_params(kp, V, H)

    out = visual_conv1d(x, *params)
    jax.block_until_ready(out)
    assert out.shape == (M, V, K)
    print("KERNEL_OK")
</pallas_src>

<mosaic_0001>
module attributes {stable_mosaic.version = 11 : i64} {
  func.func @visual_conv1d_kernel(%arg0: i32, %arg1: memref<1x16x128xf32, #tpu.memory_space<vmem>>, %arg2: memref<32x16xbf16, #tpu.memory_space<vmem>>, %arg3: memref<16x32xbf16, #tpu.memory_space<vmem>>, %arg4: memref<32x8xf32, #tpu.memory_space<vmem>>, %arg5: memref<16x8xf32, #tpu.memory_space<vmem>>, %arg6: memref<1xf32, #tpu.memory_space<smem>>, %arg7: memref<1x16x128xf32, #tpu.memory_space<vmem>>) attributes {dimension_semantics = [#tpu.dimension_semantics<parallel>], iteration_bounds = array<i64: 2>, scalar_prefetch = 0 : i64, scratch_operands = 0 : i64, tpu.core_type = #tpu.core_type<tc>, window_params = [{transform_indices = @transform_0, window_bounds = array<i64: 1, 16, 128>}, {pipeline_mode = #tpu.pipeline_mode<synchronous>, transform_indices = @transform_1, window_bounds = array<i64: 32, 16>}, {pipeline_mode = #tpu.pipeline_mode<synchronous>, transform_indices = @transform_2, window_bounds = array<i64: 16, 32>}, {pipeline_mode = #tpu.pipeline_mode<synchronous>, transform_indices = @transform_3, window_bounds = array<i64: 32, 8>}, {pipeline_mode = #tpu.pipeline_mode<synchronous>, transform_indices = @transform_4, window_bounds = array<i64: 16, 8>}, {transform_indices = @transform_5, window_bounds = array<i64: 1>}, {transform_indices = @transform_6, window_bounds = array<i64: 1, 16, 128>}]} {
    %c0 = arith.constant 0 : index
    %c0_0 = arith.constant 0 : index
    %c0_1 = arith.constant 0 : index
    %0 = vector.load %arg1[%c0, %c0_0, %c0_1] : memref<1x16x128xf32, #tpu.memory_space<vmem>>, vector<1x16x128xf32>
    %1 = vector.shape_cast %0 : vector<1x16x128xf32> to vector<16x128xf32>
    %c0_2 = arith.constant 0 : index
    %c0_3 = arith.constant 0 : index
    %2 = vector.load %arg4[%c0_2, %c0_3] : memref<32x8xf32, #tpu.memory_space<vmem>>, vector<32x8xf32>
    %3 = vector.extract_strided_slice %2 {offsets = [0, 0], sizes = [32, 1], strides = [1, 1]} : vector<32x8xf32> to vector<32x1xf32>
    %4 = vector.extract_strided_slice %2 {offsets = [0, 1], sizes = [32, 1], strides = [1, 1]} : vector<32x8xf32> to vector<32x1xf32>
    %5 = vector.extract_strided_slice %2 {offsets = [0, 2], sizes = [32, 1], strides = [1, 1]} : vector<32x8xf32> to vector<32x1xf32>
    %6 = vector.extract_strided_slice %2 {offsets = [0, 3], sizes = [32, 1], strides = [1, 1]} : vector<32x8xf32> to vector<32x1xf32>
    %7 = vector.extract_strided_slice %2 {offsets = [0, 4], sizes = [32, 1], strides = [1, 1]} : vector<32x8xf32> to vector<32x1xf32>
    %8 = vector.extract_strided_slice %2 {offsets = [0, 5], sizes = [32, 1], strides = [1, 1]} : vector<32x8xf32> to vector<32x1xf32>
    %9 = vector.extract_strided_slice %2 {offsets = [0, 6], sizes = [32, 1], strides = [1, 1]} : vector<32x8xf32> to vector<32x1xf32>
    %c0_4 = arith.constant 0 : index
    %c0_5 = arith.constant 0 : index
    %10 = vector.load %arg5[%c0_4, %c0_5] : memref<16x8xf32, #tpu.memory_space<vmem>>, vector<16x8xf32>
    %11 = vector.extract_strided_slice %10 {offsets = [0, 0], sizes = [16, 1], strides = [1, 1]} : vector<16x8xf32> to vector<16x1xf32>
    %12 = vector.extract_strided_slice %10 {offsets = [0, 1], sizes = [16, 1], strides = [1, 1]} : vector<16x8xf32> to vector<16x1xf32>
    %cst = arith.constant 1.000000e+00 : f32
    %13 = vector.broadcast %cst : f32 to vector<128x1xf32>
    %cst_6 = arith.constant 0.000000e+00 : f32
    %14 = vector.broadcast %cst_6 : f32 to vector<16x128xf32>
    %15 = arith.maximumf %1, %14 : vector<16x128xf32>
    %cst_7 = arith.constant dense<0.000000e+00> : vector<16x1xf32>
    %16 = tpu.matmul %15, %13, %cst_7 {dimension_numbers = #tpu.dot_dimension_numbers<[1], [0], [0], [1], [0, 0, 1, 1], [], []>} : vector<16x128xf32>, vector<128x1xf32>, vector<16x1xf32> -> vector<16x1xf32>
    %17 = vector.shape_cast %16 : vector<16x1xf32> to vector<1x16x1xf32>
    %cst_8 = arith.constant dense<0.000000e+00> : vector<1xf32>
    %18 = vector.multi_reduction <add>, %17, %cst_8 [1, 2] : vector<1x16x1xf32> to vector<1xf32>
    %19 = vector.shape_cast %18 : vector<1xf32> to vector<1x1x1xf32>
    %20 = vector.extract %19[0, 0, 0] : f32 from vector<1x1x1xf32>
    %21 = arith.mulf %15, %15 : vector<16x128xf32>
    %cst_9 = arith.constant dense<0.000000e+00> : vector<16x1xf32>
    %22 = tpu.matmul %21, %13, %cst_9 {dimension_numbers = #tpu.dot_dimension_numbers<[1], [0], [0], [1], [0, 0, 1, 1], [], []>} : vector<16x128xf32>, vector<128x1xf32>, vector<16x1xf32> -> vector<16x1xf32>
    %23 = vector.shape_cast %22 : vector<16x1xf32> to vector<1x16x1xf32>
    %cst_10 = arith.constant dense<0.000000e+00> : vector<1xf32>
    %24 = vector.multi_reduction <add>, %23, %cst_10 [1, 2] : vector<1x16x1xf32> to vector<1xf32>
    %25 = vector.shape_cast %24 : vector<1xf32> to vector<1x1x1xf32>
    %26 = vector.extract %25[0, 0, 0] : f32 from vector<1x1x1xf32>
    %cst_11 = arith.constant 4.8828125E-4 : f32
    %27 = arith.mulf %20, %cst_11 : f32
    %cst_12 = arith.constant 4.8828125E-4 : f32
    %28 = arith.mulf %26, %cst_12 : f32
    %29 = arith.mulf %27, %27 : f32
    %30 = arith.subf %28, %29 : f32
    %cst_13 = arith.constant 0.000000e+00 : f32
    %31 = arith.maximumf %30, %cst_13 : f32
    %cst_14 = arith.constant 9.99999993E-9 : f32
    %32 = arith.addf %31, %cst_14 : f32
    %33 = math.sqrt %32 : f32
    %c0_15 = arith.constant 0 : index
    %c0_16 = arith.constant 0 : index
    %34 = vector.load %arg2[%c0_15, %c0_16] : memref<32x16xbf16, #tpu.memory_space<vmem>>, vector<32x16xbf16>
    %35 = arith.truncf %15 : vector<16x128xf32> to vector<16x128xbf16>
    %cst_17 = arith.constant dense<0.000000e+00> : vector<32x128xf32>
    %36 = tpu.matmul %34, %35, %cst_17 {dimension_numbers = #tpu.dot_dimension_numbers<[1], [0], [0], [1], [0, 0, 1, 1], [], []>} : vector<32x16xbf16>, vector<16x128xbf16>, vector<32x128xf32> -> vector<32x128xf32>
    %37 = vector.broadcast %33 : f32 to vector<32x1xf32>
    %38 = arith.mulf %3, %37 : vector<32x1xf32>
    %39 = vector.broadcast %27 : f32 to vector<32x1xf32>
    %40 = arith.mulf %9, %39 : vector<32x1xf32>
    %41 = arith.subf %38, %40 : vector<32x1xf32>
    %42 = vector.broadcast %41 : vector<32x1xf32> to vector<32x128xf32>
    %43 = arith.addf %36, %42 : vector<32x128xf32>
    %cst_18 = arith.constant 0.000000e+00 : f32
    %44 = vector.broadcast %cst_18 : f32 to vector<32x128xf32>
    %45 = arith.maximumf %43, %44 : vector<32x128xf32>
    %cst_19 = arith.constant dense<0.000000e+00> : vector<32x1xf32>
    %46 = tpu.matmul %45, %13, %cst_19 {dimension_numbers = #tpu.dot_dimension_numbers<[1], [0], [0], [1], [0, 0, 1, 1], [], []>} : vector<32x128xf32>, vector<128x1xf32>, vector<32x1xf32> -> vector<32x1xf32>
    %47 = vector.shape_cast %46 : vector<32x1xf32> to vector<1x32x1xf32>
    %cst_20 = arith.constant dense<0.000000e+00> : vector<1xf32>
    %48 = vector.multi_reduction <add>, %47, %cst_20 [1, 2] : vector<1x32x1xf32> to vector<1xf32>
    %49 = vector.shape_cast %48 : vector<1xf32> to vector<1x1x1xf32>
    %50 = vector.extract %49[0, 0, 0] : f32 from vector<1x1x1xf32>
    %51 = arith.mulf %45, %45 : vector<32x128xf32>
    %cst_21 = arith.constant dense<0.000000e+00> : vector<32x1xf32>
    %52 = tpu.matmul %51, %13, %cst_21 {dimension_numbers = #tpu.dot_dimension_numbers<[1], [0], [0], [1], [0, 0, 1, 1], [], []>} : vector<32x128xf32>, vector<128x1xf32>, vector<32x1xf32> -> vector<32x1xf32>
    %53 = vector.shape_cast %52 : vector<32x1xf32> to vector<1x32x1xf32>
    %cst_22 = arith.constant dense<0.000000e+00> : vector<1xf32>
    %54 = vector.multi_reduction <add>, %53, %cst_22 [1, 2] : vector<1x32x1xf32> to vector<1xf32>
    %55 = vector.shape_cast %54 : vector<1xf32> to vector<1x1x1xf32>
    %56 = vector.extract %55[0, 0, 0] : f32 from vector<1x1x1xf32>
    %cst_23 = arith.constant 2.44140625E-4 : f32
    %57 = arith.mulf %50, %cst_23 : f32
    %cst_24 = arith.constant 2.44140625E-4 : f32
    %58 = arith.mulf %56, %cst_24 : f32
    %59 = arith.mulf %57, %57 : f32
    %60 = arith.subf %58, %59 : f32
    %cst_25 = arith.constant 0.000000e+00 : f32
    %61 = arith.maximumf %60, %cst_25 : f32
    %cst_26 = arith.constant 9.99999993E-9 : f32
    %62 = arith.addf %61, %cst_26 : f32
    %63 = math.rsqrt %62 : f32
    %64 = vector.broadcast %63 : f32 to vector<32x1xf32>
    %65 = arith.mulf %4, %64 : vector<32x1xf32>
    %66 = vector.broadcast %57 : f32 to vector<32x1xf32>
    %67 = arith.mulf %65, %66 : vector<32x1xf32>
    %68 = arith.subf %5, %67 : vector<32x1xf32>
    %69 = vector.broadcast %65 : vector<32x1xf32> to vector<32x128xf32>
    %70 = arith.mulf %45, %69 : vector<32x128xf32>
    %71 = vector.broadcast %68 : vector<32x1xf32> to vector<32x128xf32>
    %72 = arith.addf %70, %71 : vector<32x128xf32>
    %73 = tpu.iota {dimensions = array<i32: 1>} : vector<1x128xi32>
    %c0_i32 = arith.constant 0 : i32
    %74 = vector.broadcast %c0_i32 : i32 to vector<1x128xi32>
    %75 = arith.cmpi sgt, %73, %74 : vector<1x128xi32>
    %76 = arith.extui %75 : vector<1x128xi1> to vector<1x128xi32>
    %77 = arith.sitofp %76 : vector<1x128xi32> to vector<1x128xf32>
    %c127_i32 = arith.constant 127 : i32
    %78 = vector.broadcast %c127_i32 : i32 to vector<1x128xi32>
    %79 = arith.cmpi slt, %73, %78 : vector<1x128xi32>
    %80 = arith.extui %79 : vector<1x128xi1> to vector<1x128xi32>
    %81 = arith.sitofp %80 : vector<1x128xi32> to vector<1x128xf32>
    %c1_i32 = arith.constant 1 : i32
    %82 = tpu.dynamic_rotate %72 by %c1_i32 dim 1 : vector<32x128xf32>, i32 -> vector<32x128xf32>
    %83 = vector.broadcast %77 : vector<1x128xf32> to vector<32x128xf32>
    %84 = arith.mulf %82, %83 : vector<32x128xf32>
    %c127_i32_27 = arith.constant 127 : i32
    %85 = tpu.dynamic_rotate %72 by %c127_i32_27 dim 1 : vector<32x128xf32>, i32 -> vector<32x128xf32>
    %86 = vector.broadcast %81 : vector<1x128xf32> to vector<32x128xf32>
    %87 = arith.mulf %85, %86 : vector<32x128xf32>
    %88 = vector.broadcast %7 : vector<32x1xf32> to vector<32x128xf32>
    %89 = arith.mulf %88, %72 : vector<32x128xf32>
    %90 = vector.broadcast %6 : vector<32x1xf32> to vector<32x128xf32>
    %91 = arith.mulf %90, %84 : vector<32x128xf32>
    %92 = arith.addf %89, %91 : vector<32x128xf32>
    %93 = vector.broadcast %8 : vector<32x1xf32> to vector<32x128xf32>
    %94 = arith.mulf %93, %87 : vector<32x128xf32>
    %95 = arith.addf %92, %94 : vector<32x128xf32>
    %c0_28 = arith.constant 0 : index
    %96 = memref.load %arg6[%c0_28] : memref<1xf32, #tpu.memory_space<smem>>
    %cst_29 = arith.constant 0.000000e+00 : f32
    %97 = vector.broadcast %cst_29 : f32 to vector<32x128xf32>
    %98 = arith.cmpf ogt, %95, %97 : vector<32x128xf32>
    %99 = vector.broadcast %96 : f32 to vector<32x128xf32>
    %100 = arith.mulf %99, %95 : vector<32x128xf32>
    %101 = arith.select %98, %95, %100 : vector<32x128xi1>, vector<32x128xf32>
    %cst_30 = arith.constant dense<0.000000e+00> : vector<32x1xf32>
    %102 = tpu.matmul %101, %13, %cst_30 {dimension_numbers = #tpu.dot_dimension_numbers<[1], [0], [0], [1], [0, 0, 1, 1], [], []>} : vector<32x128xf32>, vector<128x1xf32>, vector<32x1xf32> -> vector<32x1xf32>
    %103 = vector.shape_cast %102 : vector<32x1xf32> to vector<1x32x1xf32>
    %cst_31 = arith.constant dense<0.000000e+00> : vector<1xf32>
    %104 = vector.multi_reduction <add>, %103, %cst_31 [1, 2] : vector<1x32x1xf32> to vector<1xf32>
    %105 = vector.shape_cast %104 : vector<1xf32> to vector<1x1x1xf32>
    %106 = vector.extract %105[0, 0, 0] : f32 from vector<1x1x1xf32>
    %107 = arith.mulf %101, %101 : vector<32x128xf32>
    %cst_32 = arith.constant dense<0.000000e+00> : vector<32x1xf32>
    %108 = tpu.matmul %107, %13, %cst_32 {dimension_numbers = #tpu.dot_dimension_numbers<[1], [0], [0], [1], [0, 0, 1, 1], [], []>} : vector<32x128xf32>, vector<128x1xf32>, vector<32x1xf32> -> vector<32x1xf32>
    %109 = vector.shape_cast %108 : vector<32x1xf32> to vector<1x32x1xf32>
    %cst_33 = arith.constant dense<0.000000e+00> : vector<1xf32>
    %110 = vector.multi_reduction <add>, %109, %cst_33 [1, 2] : vector<1x32x1xf32> to vector<1xf32>
    %111 = vector.shape_cast %110 : vector<1xf32> to vector<1x1x1xf32>
    %112 = vector.extract %111[0, 0, 0] : f32 from vector<1x1x1xf32>
    %cst_34 = arith.constant 2.44140625E-4 : f32
    %113 = arith.mulf %106, %cst_34 : f32
    %cst_35 = arith.constant 2.44140625E-4 : f32
    %114 = arith.mulf %112, %cst_35 : f32
    %115 = arith.mulf %113, %113 : f32
    %116 = arith.subf %114, %115 : f32
    %cst_36 = arith.constant 0.000000e+00 : f32
    %117 = arith.maximumf %116, %cst_36 : f32
    %cst_37 = arith.constant 9.99999993E-9 : f32
    %118 = arith.addf %117, %cst_37 : f32
    %119 = math.rsqrt %118 : f32
    %c0_38 = arith.constant 0 : index
    %c0_39 = arith.constant 0 : index
    %120 = vector.load %arg3[%c0_38, %c0_39] : memref<16x32xbf16, #tpu.memory_space<vmem>>, vector<16x32xbf16>
    %121 = arith.truncf %101 : vector<32x128xf32> to vector<32x128xbf16>
    %cst_40 = arith.constant dense<0.000000e+00> : vector<16x128xf32>
    %122 = tpu.matmul %120, %121, %cst_40 {dimension_numbers = #tpu.dot_dimension_numbers<[1], [0], [0], [1], [0, 0, 1, 1], [], []>} : vector<16x32xbf16>, vector<32x128xbf16>, vector<16x128xf32> -> vector<16x128xf32>
    %123 = vector.broadcast %119 : f32 to vector<16x128xf32>
    %124 = arith.mulf %122, %123 : vector<16x128xf32>
    %125 = arith.mulf %113, %119 : f32
    %126 = vector.broadcast %125 : f32 to vector<16x1xf32>
    %127 = arith.mulf %12, %126 : vector<16x1xf32>
    %128 = arith.subf %11, %127 : vector<16x1xf32>
    %129 = vector.broadcast %128 : vector<16x1xf32> to vector<16x128xf32>
    %130 = arith.addf %124, %129 : vector<16x128xf32>
    %131 = arith.addf %130, %1 : vector<16x128xf32>
    %c0_41 = arith.constant 0 : index
    %c0_42 = arith.constant 0 : index
    %c0_43 = arith.constant 0 : index
    %132 = vector.load %arg7[%c0_41, %c0_42, %c0_43] : memref<1x16x128xf32, #tpu.memory_space<vmem>>, vector<1x16x128xf32>
    %133 = vector.shape_cast %132 : vector<1x16x128xf32> to vector<16x128xf32>
    %134 = vector.shape_cast %131 : vector<16x128xf32> to vector<1x16x128xf32>
    tpu.vector_store %arg7[%c0_41, %c0_42, %c0_43], %134 {strides = array<i32>} : memref<1x16x128xf32, #tpu.memory_space<vmem>>, vector<1x16x128xf32>,
    return
  }
  func.func @transform_0(%arg0: i32) -> (i32, i32, i32) {
    %c0_i32 = arith.constant 0 : i32
    %c0_i32_0 = arith.constant 0 : i32
    %c0_i32_1 = arith.constant 0 : i32
    return %arg0, %c0_i32, %c0_i32_0 : i32, i32, i32
  }
  func.func @transform_1(%arg0: i32) -> (i32, i32) {
    %c0_i32 = arith.constant 0 : i32
    %c0_i32_0 = arith.constant 0 : i32
    %c0_i32_1 = arith.constant 0 : i32
    return %c0_i32, %c0_i32_0 : i32, i32
  }
  func.func @transform_2(%arg0: i32) -> (i32, i32) {
    %c0_i32 = arith.constant 0 : i32
    %c0_i32_0 = arith.constant 0 : i32
    %c0_i32_1 = arith.constant 0 : i32
    return %c0_i32, %c0_i32_0 : i32, i32
  }
  func.func @transform_3(%arg0: i32) -> (i32, i32) {
    %c0_i32 = arith.constant 0 : i32
    %c0_i32_0 = arith.constant 0 : i32
    %c0_i32_1 = arith.constant 0 : i32
    return %c0_i32, %c0_i32_0 : i32, i32
  }
  func.func @transform_4(%arg0: i32) -> (i32, i32) {
    %c0_i32 = arith.constant 0 : i32
    %c0_i32_0 = arith.constant 0 : i32
    %c0_i32_1 = arith.constant 0 : i32
    return %c0_i32, %c0_i32_0 : i32, i32
  }
  func.func @transform_5(%arg0: i32) -> i32 {
    %c0_i32 = arith.constant 0 : i32
    %c0_i32_0 = arith.constant 0 : i32
    return %c0_i32 : i32
  }
  func.func @transform_6(%arg0: i32) -> (i32, i32, i32) {
    %c0_i32 = arith.constant 0 : i32
    %c0_i32_0 = arith.constant 0 : i32
    %c0_i32_1 = arith.constant 0 : i32
    return %arg0, %c0_i32, %c0_i32_0 : i32, i32, i32
  }
}

</mosaic_0001>

<llo_original>
// kernel: tpu_custom_call.1
$region0: #{tpu_custom_call.1}
  #allocation0 [shape = 'u32[]', space=smem, size = 0x4, offset = 0x4, fixed_abs, tag = 'smem constant byte address 0x4 - core index']
  #allocation1 [shape = 'u32[144,128]{1,0:T(1,128)}', space=vmem, size = 0x12000, scoped, tag = 'internal scratch']
  #allocation2 [shape = 'f32[1]{0:T(128)S(6)}', space=smem, size = 0x200, scoped, tag = 'scoped memory for tpu_custom_call.1']
  %s0 = inlined_call_operand.hbm [shape: f32[2,16,128], index: 0, kind: input, shape index: {}]
  %s1 = inlined_call_operand.hbm [shape: bf16[32,16], index: 1, kind: input, shape index: {}]
  %s2 = inlined_call_operand.hbm [shape: bf16[16,32], index: 2, kind: input, shape index: {}]
  %s3 = inlined_call_operand.hbm [shape: f32[32,8], index: 3, kind: input, shape index: {}]
  %s4 = inlined_call_operand.hbm [shape: f32[16,8], index: 4, kind: input, shape index: {}]
  %s5 = inlined_call_operand.<no memory space> [shape: f32[1], index: 5, kind: input, shape index: {}]
  %s6 = inlined_call_operand.hbm [shape: f32[2,16,128], index: 6, kind: output, shape index: {}]
  %s7 = sld [smem:[#allocation0]]
  $region77: #{tpu_custom_call.1} parent=0
    _
  %s9 = ssub.s32 1, %s7
  %s10 = scalar_select 0, %s9, %s7
  %11 = sst [smem:[#allocation2]] %s5
  $region1: #{tpu_custom_call.1} parent=0
    #allocation3 [shape = 'u8[16384]{0}', space=vmem, size = 0x4000, scoped, tag = 'input window, operand 0']
    #allocation4 [shape = 's32[2]{0}', space=sflag, size = 0x8, scoped, tag = 'scoped memory for tpu_custom_call.1']
    #allocation5 [shape = 's32[2]{0}', space=sflag, size = 0x8, scoped, tag = 'scoped memory for tpu_custom_call.1']
    #allocation6 [shape = 'u8[8192]{0}', space=vmem, size = 0x2000, scoped, tag = 'input window, operand 1, single buffered']
    #allocation7 [shape = 's32[1]{0}', space=sflag, size = 0x4, scoped, tag = 'scoped memory for tpu_custom_call.1']
    #allocation8 [shape = 'u8[4096]{0}', space=vmem, size = 0x1000, scoped, tag = 'input window, operand 2, single buffered']
    #allocation9 [shape = 'u8[16384]{0}', space=vmem, size = 0x4000, scoped, tag = 'input window, operand 3, single buffered']
    #allocation10 [shape = 's32[1]{0}', space=sflag, size = 0x4, scoped, tag = 'scoped memory for tpu_custom_call.1']
    #allocation11 [shape = 'u8[8192]{0}', space=vmem, size = 0x2000, scoped, tag = 'input window, operand 4, single buffered']
    #allocation12 [shape = 'u8[16384]{0}', space=vmem, size = 0x4000, scoped, tag = 'output window, operand 0']
    %12 = vsyncpa [#allocation4], 0
    %s13 = scalar_lea.sflag [#allocation4], 1
    %14 = vsyncpa %s13, 0
    %15 = vsyncpa [#allocation7], 0
    %16 = vsyncpa [#allocation10], 0
    %17 = vsyncpa [#allocation5], 0
    %s18 = scalar_lea.sflag [#allocation5], 1
    %19 = vsyncpa %s18, 0
    loop: start=0, step=1, limit=4
    $region2: #{tpu_custom_call.1} parent=1 // loop_pre_header
      _
    $region3: #{tpu_custom_call.1} parent=1 // loop_header
      %s21 = sphi 0, %s25
      %p22 = scmp.ge.s32.totalorder %s21, 4
      %s31 = sphi 0, %s33
      %s34 = sphi 0, %s31
      %s35 = sphi 0, %s34
      %s51 = sphi 0, %s35
      %s55 = sphi 0, %s55
      %s57 = sphi 0, %s55
      %s58 = sphi 0, %s57
      %s72 = sphi 0, %s58
      %s76 = sphi 0, %s76
      %s78 = sphi 0, %s76
      %s79 = sphi 0, %s78
      %s93 = sphi 0, %s79
      %s97 = sphi 0, %s97
      %s99 = sphi 0, %s97
      %s100 = sphi 0, %s99
      %s114 = sphi 0, %s100
      %s118 = sphi 0, %s118
      %s120 = sphi 0, %s118
      %s121 = sphi 0, %s120
      %s135 = sphi 0, %s121
      %s139 = sphi 0, %s139
      %s141 = sphi 0, %s139
      %s142 = sphi 0, %s141
      %s156 = sphi 0, %s142
      %s162 = sphi 0, %s164
      %s165 = sphi 0, %s162
      %s166 = sphi 0, %s165
      %s182 = sphi 0, %s166
    $region4: #{tpu_custom_call.1} parent=1 // loop_header_branch
      %24 = sbr.rel (%p22) target = $region8
    $region5: #{tpu_custom_call.1} parent=1 // loop_body
      %s26 = ssub.s32 %s21, 1
      %s27 = ssub.s32 %s21, 2
      %s28 = sadd.s32 %s21, 1
      %s29 = ssub.s32 %s21, %s28
      %p30 = scmp.eq.s32.totalorder %s29, 0
      %s32 = sadd.s32 %s31, 1
      %s33 = scalar_select %p30, %s31, %s32
      %p36 = pneg %p30
      %p37 = scmp.eq.s32.totalorder %s21, 1
      %p38 = por %p36, %p37
      %p39 = scmp.ne.s32.totalorder %s31, %s34
      %p40 = scmp.eq.s32.totalorder %s21, 0
      %p41 = por %p39, %p40
      %p42 = scmp.ne.s32.totalorder %s31, %s34
      %p43 = scmp.eq.s32.totalorder %s26, 1
      %p44 = por %p42, %p43
      %p45 = scmp.ne.s32.totalorder %s34, %s35
      %p46 = scmp.eq.s32.totalorder %s26, 0
      %p47 = por %p45, %p46
      %p48 = scmp.ne.s32.totalorder %s34, %s35
      %p49 = scmp.eq.s32.totalorder %s27, 1
      %p50 = por %p48, %p49
      %p52 = scmp.ne.s32.totalorder %s35, %s51
      %p53 = scmp.eq.s32.totalorder %s27, 0
      %p54 = por %p52, %p53
      %s56 = sadd.s32 %s55, 1
      %p59 = scmp.eq.s32.totalorder %s21, 1
      %p60 = scmp.ne.s32.totalorder %s55, %s57
      %p61 = scmp.eq.s32.totalorder %s21, 0
      %p62 = por %p60, %p61
      %p63 = scmp.ne.s32.totalorder %s55, %s57
      %p64 = scmp.eq.s32.totalorder %s26, 1
      %p65 = por %p63, %p64
      %p66 = scmp.ne.s32.totalorder %s57, %s58
      %p67 = scmp.eq.s32.totalorder %s26, 0
      %p68 = por %p66, %p67
      %p69 = scmp.ne.s32.totalorder %s57, %s58
      %p70 = scmp.eq.s32.totalorder %s27, 1
      %p71 = por %p69, %p70
      %p73 = scmp.ne.s32.totalorder %s58, %s72
      %p74 = scmp.eq.s32.totalorder %s27, 0
      %p75 = por %p73, %p74
      %s77 = sadd.s32 %s76, 1
      %p80 = scmp.eq.s32.totalorder %s21, 1
      %p81 = scmp.ne.s32.totalorder %s76, %s78
      %p82 = scmp.eq.s32.totalorder %s21, 0
      %p83 = por %p81, %p82
      %p84 = scmp.ne.s32.totalorder %s76, %s78
      %p85 = scmp.eq.s32.totalorder %s26, 1
      %p86 = por %p84, %p85
      %p87 = scmp.ne.s32.totalorder %s78, %s79
      %p88 = scmp.eq.s32.totalorder %s26, 0
      %p89 = por %p87, %p88
      %p90 = scmp.ne.s32.totalorder %s78, %s79
      %p91 = scmp.eq.s32.totalorder %s27, 1
      %p92 = por %p90, %p91
      %p94 = scmp.ne.s32.totalorder %s79, %s93
      %p95 = scmp.eq.s32.totalorder %s27, 0
      %p96 = por %p94, %p95
      %s98 = sadd.s32 %s97, 1
      %p101 = scmp.eq.s32.totalorder %s21, 1
      %p102 = scmp.ne.s32.totalorder %s97, %s99
      %p103 = scmp.eq.s32.totalorder %s21, 0
      %p104 = por %p102, %p103
      %p105 = scmp.ne.s32.totalorder %s97, %s99
      %p106 = scmp.eq.s32.totalorder %s26, 1
      %p107 = por %p105, %p106
      %p108 = scmp.ne.s32.totalorder %s99, %s100
      %p109 = scmp.eq.s32.totalorder %s26, 0
      %p110 = por %p108, %p109
      %p111 = scmp.ne.s32.totalorder %s99, %s100
      %p112 = scmp.eq.s32.totalorder %s27, 1
      %p113 = por %p111, %p112
      %p115 = scmp.ne.s32.totalorder %s100, %s114
      %p116 = scmp.eq.s32.totalorder %s27, 0
      %p117 = por %p115, %p116
      %s119 = sadd.s32 %s118, 1
      %p122 = scmp.eq.s32.totalorder %s21, 1
      %p123 = scmp.ne.s32.totalorder %s118, %s120
      %p124 = scmp.eq.s32.totalorder %s21, 0
      %p125 = por %p123, %p124
      %p126 = scmp.ne.s32.totalorder %s118, %s120
      %p127 = scmp.eq.s32.totalorder %s26, 1
      %p128 = por %p126, %p127
      %p129 = scmp.ne.s32.totalorder %s120, %s121
      %p130 = scmp.eq.s32.totalorder %s26, 0
      %p131 = por %p129, %p130
      %p132 = scmp.ne.s32.totalorder %s120, %s121
      %p133 = scmp.eq.s32.totalorder %s27, 1
      %p134 = por %p132, %p133
      %p136 = scmp.ne.s32.totalorder %s121, %s135
      %p137 = scmp.eq.s32.totalorder %s27, 0
      %p138 = por %p136, %p137
      %s140 = sadd.s32 %s139, 1
      %p143 = scmp.eq.s32.totalorder %s21, 1
      %p144 = scmp.ne.s32.totalorder %s139, %s141
      %p145 = scmp.eq.s32.totalorder %s21, 0
      %p146 = por %p144, %p145
      %p147 = scmp.ne.s32.totalorder %s139, %s141
      %p148 = scmp.eq.s32.totalorder %s26, 1
      %p149 = por %p147, %p148
      %p150 = scmp.ne.s32.totalorder %s141, %s142
      %p151 = scmp.eq.s32.totalorder %s26, 0
      %p152 = por %p150, %p151
      %p153 = scmp.ne.s32.totalorder %s141, %s142
      %p154 = scmp.eq.s32.totalorder %s27, 1
      %p155 = por %p153, %p154
      %p157 = scmp.ne.s32.totalorder %s142, %s156
      %p158 = scmp.eq.s32.totalorder %s27, 0
      %p159 = por %p157, %p158
      %s160 = ssub.s32 %s21, %s28
      %p161 = scmp.eq.s32.totalorder %s160, 0
      %s163 = sadd.s32 %s162, 1
      %s164 = scalar_select %p161, %s162, %s163
      %p167 = pneg %p161
      %p168 = scmp.eq.s32.totalorder %s21, 1
      %p169 = por %p167, %p168
      %p170 = scmp.ne.s32.totalorder %s162, %s165
      %p171 = scmp.eq.s32.totalorder %s21, 0
      %p172 = por %p170, %p171
      %p173 = scmp.ne.s32.totalorder %s162, %s165
      %p174 = scmp.eq.s32.totalorder %s26, 1
      %p175 = por %p173, %p174
      %p176 = scmp.ne.s32.totalorder %s165, %s166
      %p177 = scmp.eq.s32.totalorder %s26, 0
      %p178 = por %p176, %p177
      %p179 = scmp.ne.s32.totalorder %s165, %s166
      %p180 = scmp.eq.s32.totalorder %s27, 1
      %p181 = por %p179, %p180
      %p183 = scmp.ne.s32.totalorder %s166, %s182
      %p184 = scmp.eq.s32.totalorder %s27, 0
      %p185 = por %p183, %p184
      %p186 = scmp.le.s32.totalorder 1, %s21
      %p187 = scmp.lt.s32.totalorder %s21, 3
      %p188 = pnand %p186, %p187
      %p189 = pneg %p188
      // Predicated region
      $region9: #{tpu_custom_call.1} parent=5 // pred_check
        _
      $region10: #{tpu_custom_call.1} parent=5 // pred_check_branch
        %191 = sbr.rel (%p188) target = $region12
      $region11: #{tpu_custom_call.1} parent=5 // pred_region
        %s192 = ssub.s32 %s21, 1
        // Predicated region
        $region13: #{tpu_custom_call.1} parent=11 // pred_check
          %p193 = pneg %p68
        $region14: #{tpu_custom_call.1} parent=11 // pred_check_branch
          %195 = sbr.rel (%p193) target = $region16
        $region15: #{tpu_custom_call.1} parent=11 // pred_region
          %s197 = ssub.s32 256, 256
          %198 = vsyncadd [#allocation7], %s197
          %s199 = sshll.u32 [#allocation6], 4
          %s200 = int_to_ptr.vmem [resolvable:$true] %s199
          %205 = dma.hbm_to_vmem [thread:$0]  %s1, 256, %s200, [#allocation7], 64, 64, 4
        $region16: #{tpu_custom_call.1} parent=11 // pred_fallthru
          _
        // Predicated region
        $region17: #{tpu_custom_call.1} parent=11 // pred_check
          %p206 = pneg %p89
        $region18: #{tpu_custom_call.1} parent=11 // pred_check_branch
          %208 = sbr.rel (%p206) target = $region20
        $region19: #{tpu_custom_call.1} parent=11 // pred_region
          %s210 = ssub.s32 128, 128
          %211 = vsyncadd [#allocation7], %s210
          %s212 = sshll.u32 [#allocation8], 4
          %s213 = int_to_ptr.vmem [resolvable:$true] %s212
          %218 = dma.hbm_to_vmem [thread:$0]  %s2, 128, %s213, [#allocation7], 64, 64, 4
        $region20: #{tpu_custom_call.1} parent=11 // pred_fallthru
          _
        // Predicated region
        $region21: #{tpu_custom_call.1} parent=11 // pred_check
          %p219 = pneg %p110
        $region22: #{tpu_custom_call.1} parent=11 // pred_check_branch
          %221 = sbr.rel (%p219) target = $region24
        $region23: #{tpu_custom_call.1} parent=11 // pred_region
          %s223 = ssub.s32 512, 512
          %224 = vsyncadd [#allocation10], %s223
          %s225 = sshll.u32 [#allocation9], 4
          %s226 = int_to_ptr.vmem [resolvable:$true] %s225
          %231 = dma.hbm_to_vmem [thread:$0]  %s3, 512, %s226, [#allocation10], 128, 128, 8
        $region24: #{tpu_custom_call.1} parent=11 // pred_fallthru
          _
        // Predicated region
        $region25: #{tpu_custom_call.1} parent=11 // pred_check
          %p232 = pneg %p131
        $region26: #{tpu_custom_call.1} parent=11 // pred_check_branch
          %234 = sbr.rel (%p232) target = $region28
        $region27: #{tpu_custom_call.1} parent=11 // pred_region
          %s236 = ssub.s32 256, 256
          %237 = vsyncadd [#allocation10], %s236
          %s238 = sshll.u32 [#allocation11], 4
          %s239 = int_to_ptr.vmem [resolvable:$true] %s238
          %244 = dma.hbm_to_vmem [thread:$0]  %s4, 256, %s239, [#allocation10], 128, 128, 8
        $region28: #{tpu_custom_call.1} parent=11 // pred_fallthru
          _
        // Predicated region
        $region29: #{tpu_custom_call.1} parent=11 // pred_check
          %p245 = pneg %p152
        $region30: #{tpu_custom_call.1} parent=11 // pred_check_branch
          %247 = sbr.rel (%p245) target = $region32
        $region31: #{tpu_custom_call.1} parent=11 // pred_region
          _
        $region32: #{tpu_custom_call.1} parent=11 // pred_fallthru
          _
      $region12: #{tpu_custom_call.1} parent=5 // pred_fallthru
        _
      %p248 = scmp.lt.s32.totalorder %s21, 2
      // Predicated region
      $region33: #{tpu_custom_call.1} parent=5 // pred_check
        %p249 = pneg %p248
      $region34: #{tpu_custom_call.1} parent=5 // pred_check_branch
        %251 = sbr.rel (%p249) target = $region36
      $region35: #{tpu_custom_call.1} parent=5 // pred_region
        // Predicated region
        $region37: #{tpu_custom_call.1} parent=35 // pred_check
          %p252 = pneg %p41
        $region38: #{tpu_custom_call.1} parent=35 // pred_check_branch
          %254 = sbr.rel (%p252) target = $region40
        $region39: #{tpu_custom_call.1} parent=35 // pred_region
          %s255 = sand.u32 %s31, 1
          %s256 = scalar_lea.sflag [#allocation4], %s255
          %s257 = sand.u32 %s31, 1
          %s258 = smul.addr %s257, 16
          %s259 = scalar_lea.vmem [#allocation3], %s258
          %s261 = ssub.s32 256, 256
          %262 = vsyncadd %s256, %s261
          %s263 = smul.addr %s21, 2
          %s264 = smul.addr %s263, 128
          %s265 = scalar_lea.hbm %s0, %s264
          %s266 = sshll.u32 %s259, 4
          %s267 = int_to_ptr.vmem [resolvable:$true] %s266
          %272 = dma.hbm_to_vmem [thread:$0]  %s265, 256, %s267, %s256, 128, 128, 8
        $region40: #{tpu_custom_call.1} parent=35 // pred_fallthru
          _
      $region36: #{tpu_custom_call.1} parent=5 // pred_fallthru
        _
      %p273 = scmp.le.s32.totalorder 1, %s21
      %p274 = scmp.lt.s32.totalorder %s21, 3
      %p275 = pnand %p273, %p274
      %p276 = pneg %p275
      // Predicated region
      $region41: #{tpu_custom_call.1} parent=5 // pred_check
        _
      $region42: #{tpu_custom_call.1} parent=5 // pred_check_branch
        %278 = sbr.rel (%p275) target = $region44
      $region43: #{tpu_custom_call.1} parent=5 // pred_region
        %s279 = ssub.s32 %s21, 1
        %s280 = sand.u32 %s34, 1
        %s281 = scalar_lea.sflag [#allocation4], %s280
        %s282 = sand.u32 %s34, 1
        %s283 = smul.addr %s282, 16
        %s284 = scalar_lea.vmem [#allocation3], %s283
        // Predicated region
        $region45: #{tpu_custom_call.1} parent=43 // pred_check
          %p285 = pneg %p47
        $region46: #{tpu_custom_call.1} parent=43 // pred_check_branch
          %287 = sbr.rel (%p285) target = $region48
        $region47: #{tpu_custom_call.1} parent=43 // pred_region
          %288 = dma.done %s281, 256
        $region48: #{tpu_custom_call.1} parent=43 // pred_fallthru
          _
        // Predicated region
        $region49: #{tpu_custom_call.1} parent=43 // pred_check
          %p289 = pneg %p68
        $region50: #{tpu_custom_call.1} parent=43 // pred_check_branch
          %291 = sbr.rel (%p289) target = $region52
        $region51: #{tpu_custom_call.1} parent=43 // pred_region
          %292 = dma.done [#allocation7], 256
        $region52: #{tpu_custom_call.1} parent=43 // pred_fallthru
          _
        // Predicated region
        $region53: #{tpu_custom_call.1} parent=43 // pred_check
          %p293 = pneg %p89
        $region54: #{tpu_custom_call.1} parent=43 // pred_check_branch
          %295 = sbr.rel (%p293) target = $region56
        $region55: #{tpu_custom_call.1} parent=43 // pred_region
          %296 = dma.done [#allocation7], 128
        $region56: #{tpu_custom_call.1} parent=43 // pred_fallthru
          _
        // Predicated region
        $region57: #{tpu_custom_call.1} parent=43 // pred_check
          %p297 = pneg %p110
        $region58: #{tpu_custom_call.1} parent=43 // pred_check_branch
          %299 = sbr.rel (%p297) target = $region60
        $region59: #{tpu_custom_call.1} parent=43 // pred_region
          %300 = dma.done [#allocation10], 512
        $region60: #{tpu_custom_call.1} parent=43 // pred_fallthru
          _
        // Predicated region
        $region61: #{tpu_custom_call.1} parent=43 // pred_check
          %p301 = pneg %p131
        $region62: #{tpu_custom_call.1} parent=43 // pred_check_branch
          %303 = sbr.rel (%p301) target = $region64
        $region63: #{tpu_custom_call.1} parent=43 // pred_region
          %304 = dma.done [#allocation10], 256
        $region64: #{tpu_custom_call.1} parent=43 // pred_fallthru
          _
        %s305 = sand.u32 %s34, 1
        %s306 = scalar_lea.sflag [#allocation4], %s305
        %s307 = sand.u32 %s34, 1
        %s308 = smul.addr %s307, 16
        %s309 = scalar_lea.vmem [#allocation3], %s308
        %p310 = pneg %p47
        %p311 = pneg %p44
        %p312 = pneg %p68
        %p313 = pneg %p65
        %p314 = pneg %p89
        %p315 = pneg %p86
        %p316 = pneg %p110
        %p317 = pneg %p107
        %p318 = pneg %p131
        %p319 = pneg %p128
        %p320 = pneg %p152
        %p321 = pneg %p149
        %p322 = pneg %p178
        %p323 = pneg %p175
        %s324 = sand.u32 %s165, 1
        %s325 = scalar_lea.sflag [#allocation5], %s324
        %s326 = sand.u32 %s165, 1
        %s327 = smul.addr %s326, 16
        %s328 = scalar_lea.vmem [#allocation12], %s327
        %v330 = vld [vmem:[%s284] sm:$0xff]
        %v331 = vld [vmem:[%s284 + $0x8] sm:$0xff]
        %v332 = vld [vmem:[#allocation9] sm:$0xff]
        %v333 = vld [vmem:[#allocation9 + $0x8] sm:$0xff]
        %v334 = vld [vmem:[#allocation9 + $0x10] sm:$0xff]
        %v335 = vld [vmem:[#allocation9 + $0x18] sm:$0xff]
        %v336 = vld [vmem:[#allocation11] sm:$0xff]
        %v337 = vld [vmem:[#allocation11 + $0x8] sm:$0xff]
        %v338 = vmax.f32 %v330, 0.0
        %v339 = vmax.f32 %v331, 0.0
        %340 = vmatprep.subr.mxu0 0.0
        %341 = vmatpush1.msra.mxu0 1.0
        %342 = vmatprep.subr.mxu0 0.0
        %343 = vmatpush1.msra.mxu0 1.0
        %344 = vmatprep.subr.mxu0 0.0
        %345 = vmatpush1.msra.mxu0 1.0
        %346 = vmatprep.subr.mxu0 0.0
        %347 = vmatpush1.msra.mxu0 1.0
        %348 = vmatprep.subr.mxu0 0.0
        %349 = vmatpush1.msra.mxu0 1.0
        %350 = vmatprep.subr.mxu0 0.0
        %351 = vmatpush1.msra.mxu0 1.0
        %352 = vmatprep.subr.mxu0 0.0
        %353 = vmatpush1.msra.mxu0 1.0
        %354 = vmatprep.subr.mxu0 0.0
        %355 = vmatpush1.msra.mxu0 1.0
        %356 = vmatprep.subr.mxu0 0.0
        %357 = vmatpush1.msra.mxu0 1.0
        %358 = vmatprep.subr.mxu0 0.0
        %359 = vmatpush1.msra.mxu0 1.0
        %360 = vmatprep.subr.mxu0 0.0
        %361 = vmatpush1.msra.mxu0 1.0
        %362 = vmatprep.subr.mxu0 0.0
        %363 = vmatpush1.msra.mxu0 1.0
        %364 = vmatprep.subr.mxu0 0.0
        %365 = vmatpush1.msra.mxu0 1.0
        %366 = vmatprep.subr.mxu0 0.0
        %367 = vmatpush1.msra.mxu0 1.0
        %368 = vmatprep.subr.mxu0 0.0
        %369 = vmatpush1.msra.mxu0 1.0
        %370 = vmatprep.subr.mxu0 0.0
        %371 = vmatpush1.msra.mxu0 1.0
        %372 = vmatprep.subr.mxu0 0.0
        %373 = vmatpush1.msra.mxu0 0.0
        %374 = vmatprep.subr.mxu0 0.0
        %375 = vmatpush1.msra.mxu0 0.0
        %376 = vmatprep.subr.mxu0 0.0
        %377 = vmatpush1.msra.mxu0 0.0
        %378 = vmatprep.subr.mxu0 0.0
        %379 = vmatpush1.msra.mxu0 0.0
        %380 = vmatprep.subr.mxu0 0.0
        %381 = vmatpush1.msra.mxu0 0.0
        %382 = vmatprep.subr.mxu0 0.0
        %383 = vmatpush1.msra.mxu0 0.0
        %384 = vmatprep.subr.mxu0 0.0
        %385 = vmatpush1.msra.mxu0 0.0
        %386 = vmatprep.subr.mxu0 0.0
        %387 = vmatpush1.msra.mxu0 0.0
        %388 = vmatprep.subr.mxu0 0.0
        %389 = vmatpush1.msra.mxu0 0.0
        %390 = vmatprep.subr.mxu0 0.0
        %391 = vmatpush1.msra.mxu0 0.0
        %392 = vmatprep.subr.mxu0 0.0
        %393 = vmatpush1.msra.mxu0 0.0
        %394 = vmatprep.subr.mxu0 0.0
        %395 = vmatpush1.msra.mxu0 0.0
        %396 = vmatprep.subr.mxu0 0.0
        %397 = vmatpush1.msra.mxu0 0.0
        %398 = vmatprep.subr.mxu0 0.0
        %399 = vmatpush1.msra.mxu0 0.0
        %400 = vmatprep.subr.mxu0 0.0
        %401 = vmatpush1.msra.mxu0 0.0
        %402 = vmatprep.subr.mxu0 0.0
        %403 = vmatpush1.msra.mxu0 0.0
        %404 = vmatprep.mubr.f32.mxu0 0.0
        %405 = vmatmul.mubr.f32.gmra.mrb[0].mxu0 %v338
        %v406 = vpop.f32.mrb[0].mxu0
        %v407 = vadd.f32 0.0, %v406
        %v408 = vpop.f32.mrb[0].mxu0
        %409 = vmatprep.mubr.f32.mxu0 0.0
        %410 = vmatmul.mubr.f32.gmra.mrb[0].mxu0 %v339
        %v411 = vpop.f32.mrb[0].mxu0
        %v412 = vadd.f32 0.0, %v411
        %v413 = vpop.f32.mrb[0].mxu0
        %414 = vdwg.mxu0
        %vm415 = vcmask 7168
        %v416 = vsel %vm415, %v407, 0.0
        %v417 = vsel %vm415, %v412, 0.0
        %v418 = vadd.f32 %v416, %v417
        %419 = vadd.xlane.f32.xlu0 %v418
        %v420 = vpop.xlane.xlu0 %419
        %v421 = vrot.slane %v420, 4
        %v422 = vadd.f32 %v420, %v421
        %v423 = vrot.slane %v422, 2
        %v424 = vadd.f32 %v422, %v423
        %v425 = vrot.slane %v424, 1
        %v426 = vadd.f32 %v424, %v425
        %s427 = vtos %v426
        %v428 = vmul.f32 %v338, %v338
        %v429 = vmul.f32 %v339, %v339
        %430 = vmatprep.subr.mxu0 0.0
        %431 = vmatpush1.msra.mxu0 1.0
        %432 = vmatprep.subr.mxu0 0.0
        %433 = vmatpush1.msra.mxu0 1.0
        %434 = vmatprep.subr.mxu0 0.0
        %435 = vmatpush1.msra.mxu0 1.0
        %436 = vmatprep.subr.mxu0 0.0
        %437 = vmatpush1.msra.mxu0 1.0
        %438 = vmatprep.subr.mxu0 0.0
        %439 = vmatpush1.msra.mxu0 1.0
        %440 = vmatprep.subr.mxu0 0.0
        %441 = vmatpush1.msra.mxu0 1.0
        %442 = vmatprep.subr.mxu0 0.0
        %443 = vmatpush1.msra.mxu0 1.0
        %444 = vmatprep.subr.mxu0 0.0
        %445 = vmatpush1.msra.mxu0 1.0
        %446 = vmatprep.subr.mxu0 0.0
        %447 = vmatpush1.msra.mxu0 1.0
        %448 = vmatprep.subr.mxu0 0.0
        %449 = vmatpush1.msra.mxu0 1.0
        %450 = vmatprep.subr.mxu0 0.0
        %451 = vmatpush1.msra.mxu0 1.0
        %452 = vmatprep.subr.mxu0 0.0
        %453 = vmatpush1.msra.mxu0 1.0
        %454 = vmatprep.subr.mxu0 0.0
        %455 = vmatpush1.msra.mxu0 1.0
        %456 = vmatprep.subr.mxu0 0.0
        %457 = vmatpush1.msra.mxu0 1.0
        %458 = vmatprep.subr.mxu0 0.0
        %459 = vmatpush1.msra.mxu0 1.0
        %460 = vmatprep.subr.mxu0 0.0
        %461 = vmatpush1.msra.mxu0 1.0
        %462 = vmatprep.subr.mxu0 0.0
        %463 = vmatpush1.msra.mxu0 0.0
        %464 = vmatprep.subr.mxu0 0.0
        %465 = vmatpush1.msra.mxu0 0.0
        %466 = vmatprep.subr.mxu0 0.0
        %467 = vmatpush1.msra.mxu0 0.0
        %468 = vmatprep.subr.mxu0 0.0
        %469 = vmatpush1.msra.mxu0 0.0
        %470 = vmatprep.subr.mxu0 0.0
        %471 = vmatpush1.msra.mxu0 0.0
        %472 = vmatprep.subr.mxu0 0.0
        %473 = vmatpush1.msra.mxu0 0.0
        %474 = vmatprep.subr.mxu0 0.0
        %475 = vmatpush1.msra.mxu0 0.0
        %476 = vmatprep.subr.mxu0 0.0
        %477 = vmatpush1.msra.mxu0 0.0
        %478 = vmatprep.subr.mxu0 0.0
        %479 = vmatpush1.msra.mxu0 0.0
        %480 = vmatprep.subr.mxu0 0.0
        %481 = vmatpush1.msra.mxu0 0.0
        %482 = vmatprep.subr.mxu0 0.0
        %483 = vmatpush1.msra.mxu0 0.0
        %484 = vmatprep.subr.mxu0 0.0
        %485 = vmatpush1.msra.mxu0 0.0
        %486 = vmatprep.subr.mxu0 0.0
        %487 = vmatpush1.msra.mxu0 0.0
        %488 = vmatprep.subr.mxu0 0.0
        %489 = vmatpush1.msra.mxu0 0.0
        %490 = vmatprep.subr.mxu0 0.0
        %491 = vmatpush1.msra.mxu0 0.0
        %492 = vmatprep.subr.mxu0 0.0
        %493 = vmatpush1.msra.mxu0 0.0
        %494 = vmatprep.mubr.f32.mxu0 0.0
        %495 = vmatmul.mubr.f32.gmra.mrb[0].mxu0 %v428
        %v496 = vpop.f32.mrb[0].mxu0
        %v497 = vadd.f32 0.0, %v496
        %v498 = vpop.f32.mrb[0].mxu0
        %499 = vmatprep.mubr.f32.mxu0 0.0
        %500 = vmatmul.mubr.f32.gmra.mrb[0].mxu0 %v429
        %v501 = vpop.f32.mrb[0].mxu0
        %v502 = vadd.f32 0.0, %v501
        %v503 = vpop.f32.mrb[0].mxu0
        %504 = vdwg.mxu0
        %v505 = vsel %vm415, %v497, 0.0
        %v506 = vsel %vm415, %v502, 0.0
        %v507 = vadd.f32 %v505, %v506
        %508 = vadd.xlane.f32.xlu0 %v507
        %v509 = vpop.xlane.xlu0 %508
        %v510 = vrot.slane %v509, 4
        %v511 = vadd.f32 %v509, %v510
        %v512 = vrot.slane %v511, 2
        %v513 = vadd.f32 %v511, %v512
        %v514 = vrot.slane %v513, 1
        %v515 = vadd.f32 %v513, %v514
        %s516 = vtos %v515
        %s517 = smul.f32 %s427, 0.00048828125
        %s518 = smul.f32 %s516, 0.00048828125
        %s519 = smul.f32 %s517, %s517
        %s520 = ssub.f32 %s518, %s519
        %s521 = smax.f32 %s520, 0.0
        %s522 = sadd.f32 %s521, 1e-08
        %v523 = vstv %s522
        %v524 = vrsqrt.pop %v523
        %v525 = vmul.f32 %v523, %v524
        %vm526 = vcmp.eq.f32.partialorder %v523, inf
        %v527 = vsel %vm526, %v523, %v525
        %vm528 = vcmp.eq.f32.partialorder %v523, 0.0
        %v529 = vand.u32 %v523, 2147483648
        %v530 = vsel %vm528, %v529, %v527
        %s531 = vtos %v530
        %v532 = vld [vmem:[#allocation6] sm:$0xf]
        %v533 = vld [vmem:[#allocation6 + $0x4] sm:$0xf]
        %v534 = vld [vmem:[#allocation6 + $0x8] sm:$0xf]
        %v535 = vld [vmem:[#allocation6 + $0xc] sm:$0xf]
        %v536 = vpack.c.bf16 %v339, %v338
        %v537 = vstv %s531
        %v538 = vmul.f32 %v332, %v537
        %v539 = vmul.f32 %v333, %v537
        %v540 = vmul.f32 %v334, %v537
        %v541 = vmul.f32 %v335, %v537
        %v542 = vstv %s517
        %v543 = vmul.f32 %v332, %v542
        %v544 = vmul.f32 %v333, %v542
        %v545 = vmul.f32 %v334, %v542
        %v546 = vmul.f32 %v335, %v542
        %551 = vrot.lane.b32.xlu0 %v543, 122
        %v552 = vpop.permute.xlu0 %551
        %553 = vrot.lane.b32.xlu0 %v544, 122
        %v554 = vpop.permute.xlu0 %553
        %555 = vrot.lane.b32.xlu0 %v545, 122
        %v556 = vpop.permute.xlu0 %555
        %557 = vrot.lane.b32.xlu0 %v546, 122
        %v558 = vpop.permute.xlu0 %557
        %v563 = vsub.f32 %v538, %v552
        %v564 = vsub.f32 %v539, %v554
        %v565 = vsub.f32 %v540, %v556
        %v566 = vsub.f32 %v541, %v558
        %568 = vset.pattern.permute.xlu0 0
        %569 = vperm.xlu0 %568, %v563
        %v570 = vpop.permute.xlu0 %569
        %573 = vset.pattern.permute.xlu0 0
        %574 = vperm.xlu0 %573, %v564
        %v575 = vpop.permute.xlu0 %574
        %578 = vset.pattern.permute.xlu0 0
        %579 = vperm.xlu0 %578, %v565
        %v580 = vpop.permute.xlu0 %579
        %583 = vset.pattern.permute.xlu0 0
        %584 = vperm.xlu0 %583, %v566
        %v585 = vpop.permute.xlu0 %584
        %v591 = vunpack.c.l.b16 %v532
        %v592 = vunpack.c.l.b16 %v533
        %v593 = vunpack.c.l.b16 %v534
        %v594 = vunpack.c.l.b16 %v535
        %v595 = vpack.c.b16 %v592, %v591
        %v596 = vpack.c.b16 %v594, %v593
        %vm597 = vcmask 130048
        %v599 = vsel %vm597, %v595, 0
        %v602 = vsel %vm597, %v596, 0
        %604 = vmatprep.subr.bf16.mxu0 0
        %605 = vmatpush1.bf16.msra.mxu0 %v536
        %606 = vmatprep.subr.bf16.mxu0 0
        %607 = vmatpush1.bf16.msra.mxu0 0
        %608 = vmatprep.subr.bf16.mxu0 0
        %609 = vmatpush1.bf16.msra.mxu0 0
        %610 = vmatprep.subr.bf16.mxu0 0
        %611 = vmatpush1.bf16.msra.mxu0 0
        %612 = vmatprep.subr.bf16.mxu0 0
        %613 = vmatpush1.bf16.msra.mxu0 0
        %614 = vmatprep.subr.bf16.mxu0 0
        %615 = vmatpush1.bf16.msra.mxu0 0
        %616 = vmatprep.subr.bf16.mxu0 0
        %617 = vmatpush1.bf16.msra.mxu0 0
        %618 = vmatprep.subr.bf16.mxu0 0
        %619 = vmatpush1.bf16.msra.mxu0 0
        %620 = vmatprep.subr.bf16.mxu0 0
        %621 = vmatpush1.bf16.msra.mxu0 0
        %622 = vmatprep.subr.bf16.mxu0 0
        %623 = vmatpush1.bf16.msra.mxu0 0
        %624 = vmatprep.subr.bf16.mxu0 0
        %625 = vmatpush1.bf16.msra.mxu0 0
        %626 = vmatprep.subr.bf16.mxu0 0
        %627 = vmatpush1.bf16.msra.mxu0 0
        %628 = vmatprep.subr.bf16.mxu0 0
        %629 = vmatpush1.bf16.msra.mxu0 0
        %630 = vmatprep.subr.bf16.mxu0 0
        %631 = vmatpush1.bf16.msra.mxu0 0
        %632 = vmatprep.subr.bf16.mxu0 0
        %633 = vmatpush1.bf16.msra.mxu0 0
        %634 = vmatprep.subr.bf16.mxu0 0
        %635 = vmatpush1.bf16.msra.mxu0 0
        %636 = vmatprep.mubr.bf16.mxu0 0
        %637 = vmatmul.mubr.bf16.gmra.mrb[0].mxu0 %v599
        %v638 = vpop.f32.mrb[0].mxu0
        %v639 = vadd.f32 %v570, %v638
        %v640 = vpop.f32.mrb[0].mxu0
        %v641 = vpop.f32.mrb[0].mxu0
        %v642 = vadd.f32 %v575, %v641
        %v643 = vpop.f32.mrb[0].mxu0
        %644 = vmatprep.mubr.bf16.mxu0 0
        %645 = vmatmul.mubr.bf16.gmra.mrb[0].mxu0 %v602
        %v646 = vpop.f32.mrb[0].mxu0
        %v647 = vadd.f32 %v580, %v646
        %v648 = vpop.f32.mrb[0].mxu0
        %v649 = vpop.f32.mrb[0].mxu0
        %v650 = vadd.f32 %v585, %v649
        %v651 = vpop.f32.mrb[0].mxu0
        %652 = vdwg.mxu0
        %v653 = vmax.f32 %v639, 0.0
        %v654 = vmax.f32 %v642, 0.0
        %v655 = vmax.f32 %v647, 0.0
        %v656 = vmax.f32 %v650, 0.0
        %657 = vmatprep.subr.mxu0 0.0
        %658 = vmatpush1.msra.mxu0 1.0
        %659 = vmatprep.subr.mxu0 0.0
        %660 = vmatpush1.msra.mxu0 1.0
        %661 = vmatprep.subr.mxu0 0.0
        %662 = vmatpush1.msra.mxu0 1.0
        %663 = vmatprep.subr.mxu0 0.0
        %664 = vmatpush1.msra.mxu0 1.0
        %665 = vmatprep.subr.mxu0 0.0
        %666 = vmatpush1.msra.mxu0 1.0
        %667 = vmatprep.subr.mxu0 0.0
        %668 = vmatpush1.msra.mxu0 1.0
        %669 = vmatprep.subr.mxu0 0.0
        %670 = vmatpush1.msra.mxu0 1.0
        %671 = vmatprep.subr.mxu0 0.0
        %672 = vmatpush1.msra.mxu0 1.0
        %673 = vmatprep.subr.mxu0 0.0
        %674 = vmatpush1.msra.mxu0 1.0
        %675 = vmatprep.subr.mxu0 0.0
        %676 = vmatpush1.msra.mxu0 1.0
        %677 = vmatprep.subr.mxu0 0.0
        %678 = vmatpush1.msra.mxu0 1.0
        %679 = vmatprep.subr.mxu0 0.0
        %680 = vmatpush1.msra.mxu0 1.0
        %681 = vmatprep.subr.mxu0 0.0
        %682 = vmatpush1.msra.mxu0 1.0
        %683 = vmatprep.subr.mxu0 0.0
        %684 = vmatpush1.msra.mxu0 1.0
        %685 = vmatprep.subr.mxu0 0.0
        %686 = vmatpush1.msra.mxu0 1.0
        %687 = vmatprep.subr.mxu0 0.0
        %688 = vmatpush1.msra.mxu0 1.0
        %689 = vmatprep.subr.mxu0 0.0
        %690 = vmatpush1.msra.mxu0 0.0
        %691 = vmatprep.subr.mxu0 0.0
        %692 = vmatpush1.msra.mxu0 0.0
        %693 = vmatprep.subr.mxu0 0.0
        %694 = vmatpush1.msra.mxu0 0.0
        %695 = vmatprep.subr.mxu0 0.0
        %696 = vmatpush1.msra.mxu0 0.0
        %697 = vmatprep.subr.mxu0 0.0
        %698 = vmatpush1.msra.mxu0 0.0
        %699 = vmatprep.subr.mxu0 0.0
        %700 = vmatpush1.msra.mxu0 0.0
        %701 = vmatprep.subr.mxu0 0.0
        %702 = vmatpush1.msra.mxu0 0.0
        %703 = vmatprep.subr.mxu0 0.0
        %704 = vmatpush1.msra.mxu0 0.0
        %705 = vmatprep.subr.mxu0 0.0
        %706 = vmatpush1.msra.mxu0 0.0
        %707 = vmatprep.subr.mxu0 0.0
        %708 = vmatpush1.msra.mxu0 0.0
        %709 = vmatprep.subr.mxu0 0.0
        %710 = vmatpush1.msra.mxu0 0.0
        %711 = vmatprep.subr.mxu0 0.0
        %712 = vmatpush1.msra.mxu0 0.0
        %713 = vmatprep.subr.mxu0 0.0
        %714 = vmatpush1.msra.mxu0 0.0
        %715 = vmatprep.subr.mxu0 0.0
        %716 = vmatpush1.msra.mxu0 0.0
        %717 = vmatprep.subr.mxu0 0.0
        %718 = vmatpush1.msra.mxu0 0.0
        %719 = vmatprep.subr.mxu0 0.0
        %720 = vmatpush1.msra.mxu0 0.0
        %721 = vmatprep.mubr.f32.mxu0 0.0
        %722 = vmatmul.mubr.f32.gmra.mrb[0].mxu0 %v653
        %v723 = vpop.f32.mrb[0].mxu0
        %v724 = vadd.f32 0.0, %v723
        %v725 = vpop.f32.mrb[0].mxu0
        %726 = vmatprep.mubr.f32.mxu0 0.0
        %727 = vmatmul.mubr.f32.gmra.mrb[0].mxu0 %v654
        %v728 = vpop.f32.mrb[0].mxu0
        %v729 = vadd.f32 0.0, %v728
        %v730 = vpop.f32.mrb[0].mxu0
        %731 = vmatprep.mubr.f32.mxu0 0.0
        %732 = vmatmul.mubr.f32.gmra.mrb[0].mxu0 %v655
        %v733 = vpop.f32.mrb[0].mxu0
        %v734 = vadd.f32 0.0, %v733
        %v735 = vpop.f32.mrb[0].mxu0
        %736 = vmatprep.mubr.f32.mxu0 0.0
        %737 = vmatmul.mubr.f32.gmra.mrb[0].mxu0 %v656
        %v738 = vpop.f32.mrb[0].mxu0
        %v739 = vadd.f32 0.0, %v738
        %v740 = vpop.f32.mrb[0].mxu0
        %741 = vdwg.mxu0
        %v742 = vsel %vm415, %v724, 0.0
        %v743 = vsel %vm415, %v729, 0.0
        %v744 = vadd.f32 %v742, %v743
        %v745 = vsel %vm415, %v734, 0.0
        %v746 = vadd.f32 %v744, %v745
        %v747 = vsel %vm415, %v739, 0.0
        %v748 = vadd.f32 %v746, %v747
        %749 = vadd.xlane.f32.xlu0 %v748
        %v750 = vpop.xlane.xlu0 %749
        %v751 = vrot.slane %v750, 4
        %v752 = vadd.f32 %v750, %v751
        %v753 = vrot.slane %v752, 2
        %v754 = vadd.f32 %v752, %v753
        %v755 = vrot.slane %v754, 1
        %v756 = vadd.f32 %v754, %v755
        %s757 = vtos %v756
        %v758 = vmul.f32 %v653, %v653
        %v759 = vmul.f32 %v654, %v654
        %v760 = vmul.f32 %v655, %v655
        %v761 = vmul.f32 %v656, %v656
        %762 = vmatprep.subr.mxu0 0.0
        %763 = vmatpush1.msra.mxu0 1.0
        %764 = vmatprep.subr.mxu0 0.0
        %765 = vmatpush1.msra.mxu0 1.0
        %766 = vmatprep.subr.mxu0 0.0
        %767 = vmatpush1.msra.mxu0 1.0
        %768 = vmatprep.subr.mxu0 0.0
        %769 = vmatpush1.msra.mxu0 1.0
        %770 = vmatprep.subr.mxu0 0.0
        %771 = vmatpush1.msra.mxu0 1.0
        %772 = vmatprep.subr.mxu0 0.0
        %773 = vmatpush1.msra.mxu0 1.0
        %774 = vmatprep.subr.mxu0 0.0
        %775 = vmatpush1.msra.mxu0 1.0
        %776 = vmatprep.subr.mxu0 0.0
        %777 = vmatpush1.msra.mxu0 1.0
        %778 = vmatprep.subr.mxu0 0.0
        %779 = vmatpush1.msra.mxu0 1.0
        %780 = vmatprep.subr.mxu0 0.0
        %781 = vmatpush1.msra.mxu0 1.0
        %782 = vmatprep.subr.mxu0 0.0
        %783 = vmatpush1.msra.mxu0 1.0
        %784 = vmatprep.subr.mxu0 0.0
        %785 = vmatpush1.msra.mxu0 1.0
        %786 = vmatprep.subr.mxu0 0.0
        %787 = vmatpush1.msra.mxu0 1.0
        %788 = vmatprep.subr.mxu0 0.0
        %789 = vmatpush1.msra.mxu0 1.0
        %790 = vmatprep.subr.mxu0 0.0
        %791 = vmatpush1.msra.mxu0 1.0
        %792 = vmatprep.subr.mxu0 0.0
        %793 = vmatpush1.msra.mxu0 1.0
        %794 = vmatprep.subr.mxu0 0.0
        %795 = vmatpush1.msra.mxu0 0.0
        %796 = vmatprep.subr.mxu0 0.0
        %797 = vmatpush1.msra.mxu0 0.0
        %798 = vmatprep.subr.mxu0 0.0
        %799 = vmatpush1.msra.mxu0 0.0
        %800 = vmatprep.subr.mxu0 0.0
        %801 = vmatpush1.msra.mxu0 0.0
        %802 = vmatprep.subr.mxu0 0.0
        %803 = vmatpush1.msra.mxu0 0.0
        %804 = vmatprep.subr.mxu0 0.0
        %805 = vmatpush1.msra.mxu0 0.0
        %806 = vmatprep.subr.mxu0 0.0
        %807 = vmatpush1.msra.mxu0 0.0
        %808 = vmatprep.subr.mxu0 0.0
        %809 = vmatpush1.msra.mxu0 0.0
        %810 = vmatprep.subr.mxu0 0.0
        %811 = vmatpush1.msra.mxu0 0.0
        %812 = vmatprep.subr.mxu0 0.0
        %813 = vmatpush1.msra.mxu0 0.0
        %814 = vmatprep.subr.mxu0 0.0
        %815 = vmatpush1.msra.mxu0 0.0
        %816 = vmatprep.subr.mxu0 0.0
        %817 = vmatpush1.msra.mxu0 0.0
        %818 = vmatprep.subr.mxu0 0.0
        %819 = vmatpush1.msra.mxu0 0.0
        %820 = vmatprep.subr.mxu0 0.0
        %821 = vmatpush1.msra.mxu0 0.0
        %822 = vmatprep.subr.mxu0 0.0
        %823 = vmatpush1.msra.mxu0 0.0
        %824 = vmatprep.subr.mxu0 0.0
        %825 = vmatpush1.msra.mxu0 0.0
        %826 = vmatprep.mubr.f32.mxu0 0.0
        %827 = vmatmul.mubr.f32.gmra.mrb[0].mxu0 %v758
        %v828 = vpop.f32.mrb[0].mxu0
        %v829 = vadd.f32 0.0, %v828
        %v830 = vpop.f32.mrb[0].mxu0
        %831 = vmatprep.mubr.f32.mxu0 0.0
        %832 = vmatmul.mubr.f32.gmra.mrb[0].mxu0 %v759
        %v833 = vpop.f32.mrb[0].mxu0
        %v834 = vadd.f32 0.0, %v833
        %v835 = vpop.f32.mrb[0].mxu0
        %836 = vmatprep.mubr.f32.mxu0 0.0
        %837 = vmatmul.mubr.f32.gmra.mrb[0].mxu0 %v760
        %v838 = vpop.f32.mrb[0].mxu0
        %v839 = vadd.f32 0.0, %v838
        %v840 = vpop.f32.mrb[0].mxu0
        %841 = vmatprep.mubr.f32.mxu0 0.0
        %842 = vmatmul.mubr.f32.gmra.mrb[0].mxu0 %v761
        %v843 = vpop.f32.mrb[0].mxu0
        %v844 = vadd.f32 0.0, %v843
        %v845 = vpop.f32.mrb[0].mxu0
        %846 = vdwg.mxu0
        %v847 = vsel %vm415, %v829, 0.0
        %v848 = vsel %vm415, %v834, 0.0
        %v849 = vadd.f32 %v847, %v848
        %v850 = vsel %vm415, %v839, 0.0
        %v851 = vadd.f32 %v849, %v850
        %v852 = vsel %vm415, %v844, 0.0
        %v853 = vadd.f32 %v851, %v852
        %854 = vadd.xlane.f32.xlu0 %v853
        %v855 = vpop.xlane.xlu0 %854
        %v856 = vrot.slane %v855, 4
        %v857 = vadd.f32 %v855, %v856
        %v858 = vrot.slane %v857, 2
        %v859 = vadd.f32 %v857, %v858
        %v860 = vrot.slane %v859, 1
        %v861 = vadd.f32 %v859, %v860
        %s862 = vtos %v861
        %s863 = smul.f32 %s757, 0.00024414063
        %s864 = smul.f32 %s862, 0.00024414063
        %s865 = smul.f32 %s863, %s863
        %s866 = ssub.f32 %s864, %s865
        %s867 = smax.f32 %s866, 0.0
        %s868 = sadd.f32 %s867, 1e-08
        %v869 = vstv %s868
        %v870 = vrsqrt.pop %v869
        %s871 = vtos %v870
        %v872 = vstv %s871
        %v873 = vmul.f32 %v332, %v872
        %v874 = vmul.f32 %v333, %v872
        %v875 = vmul.f32 %v334, %v872
        %v876 = vmul.f32 %v335, %v872
        %v877 = vstv %s863
        %v878 = vmul.f32 %v873, %v877
        %v879 = vmul.f32 %v874, %v877
        %v880 = vmul.f32 %v875, %v877
        %v881 = vmul.f32 %v876, %v877
        %886 = vrot.lane.b32.xlu0 %v878, 1
        %v887 = vpop.permute.xlu0 %886
        %888 = vrot.lane.b32.xlu0 %v879, 1
        %v889 = vpop.permute.xlu0 %888
        %890 = vrot.lane.b32.xlu0 %v880, 1
        %v891 = vpop.permute.xlu0 %890
        %892 = vrot.lane.b32.xlu0 %v881, 1
        %v893 = vpop.permute.xlu0 %892
        %v898 = vsub.f32 %v332, %v887
        %v899 = vsub.f32 %v333, %v889
        %v900 = vsub.f32 %v334, %v891
        %v901 = vsub.f32 %v335, %v893
        %903 = vset.pattern.permute.xlu0 1
        %904 = vperm.xlu0 %903, %v873
        %v905 = vpop.permute.xlu0 %904
        %908 = vset.pattern.permute.xlu0 1
        %909 = vperm.xlu0 %908, %v874
        %v910 = vpop.permute.xlu0 %909
        %913 = vset.pattern.permute.xlu0 1
        %914 = vperm.xlu0 %913, %v875
        %v915 = vpop.permute.xlu0 %914
        %918 = vset.pattern.permute.xlu0 1
        %919 = vperm.xlu0 %918, %v876
        %v920 = vpop.permute.xlu0 %919
        %v922 = vmul.f32 %v653, %v905
        %v923 = vmul.f32 %v654, %v910
        %v924 = vmul.f32 %v655, %v915
        %v925 = vmul.f32 %v656, %v920
        %927 = vset.pattern.permute.xlu0 2
        %928 = vperm.xlu0 %927, %v898
        %v929 = vpop.permute.xlu0 %928
        %932 = vset.pattern.permute.xlu0 2
        %933 = vperm.xlu0 %932, %v899
        %v934 = vpop.permute.xlu0 %933
        %937 = vset.pattern.permute.xlu0 2
        %938 = vperm.xlu0 %937, %v900
        %v939 = vpop.permute.xlu0 %938
        %942 = vset.pattern.permute.xlu0 2
        %943 = vperm.xlu0 %942, %v901
        %v944 = vpop.permute.xlu0 %943
        %v946 = vadd.f32 %v922, %v929
        %v947 = vadd.f32 %v923, %v934
        %v948 = vadd.f32 %v924, %v939
        %v949 = vadd.f32 %v925, %v944
        %v950 = vlaneseq
        %v951 = vand.u32 %v950, 127
        %vm952 = vcmp.gt.s32.totalorder %v951, 0
        %v953 = vsel %vm952, 1, 0
        %v954 = vcvt.s32.f32 %v953
        %vm955 = vcmp.lt.s32.totalorder %v951, 127
        %v956 = vsel %vm955, 1, 0
        %v957 = vcvt.s32.f32 %v956
        %958 = vrot.lane.b32.xlu0 %v946, 1
        %v959 = vpop.permute.xlu0 %958
        %960 = vrot.lane.b32.xlu0 %v947, 1
        %v961 = vpop.permute.xlu0 %960
        %962 = vrot.lane.b32.xlu0 %v948, 1
        %v963 = vpop.permute.xlu0 %962
        %964 = vrot.lane.b32.xlu0 %v949, 1
        %v965 = vpop.permute.xlu0 %964
        %v966 = vmul.f32 %v959, %v954
        %v967 = vmul.f32 %v961, %v954
        %v968 = vmul.f32 %v963, %v954
        %v969 = vmul.f32 %v965, %v954
        %970 = vrot.lane.b32.xlu0 %v946, 127
        %v971 = vpop.permute.xlu0 %970
        %972 = vrot.lane.b32.xlu0 %v947, 127
        %v973 = vpop.permute.xlu0 %972
        %974 = vrot.lane.b32.xlu0 %v948, 127
        %v975 = vpop.permute.xlu0 %974
        %976 = vrot.lane.b32.xlu0 %v949, 127
        %v977 = vpop.permute.xlu0 %976
        %v978 = vmul.f32 %v971, %v957
        %v979 = vmul.f32 %v973, %v957
        %v980 = vmul.f32 %v975, %v957
        %v981 = vmul.f32 %v977, %v957
        %983 = vset.pattern.permute.xlu0 4
        %984 = vperm.xlu0 %983, %v332
        %v985 = vpop.permute.xlu0 %984
        %988 = vset.pattern.permute.xlu0 4
        %989 = vperm.xlu0 %988, %v333
        %v990 = vpop.permute.xlu0 %989
        %993 = vset.pattern.permute.xlu0 4
        %994 = vperm.xlu0 %993, %v334
        %v995 = vpop.permute.xlu0 %994
        %998 = vset.pattern.permute.xlu0 4
        %999 = vperm.xlu0 %998, %v335
        %v1000 = vpop.permute.xlu0 %999
        %v1002 = vmul.f32 %v985, %v946
        %v1003 = vmul.f32 %v990, %v947
        %v1004 = vmul.f32 %v995, %v948
        %v1005 = vmul.f32 %v1000, %v949
        %1006 = vset.pattern.permute.xlu0 3
        %1007 = vperm.xlu0 %1006, %v332
        %v1008 = vpop.permute.xlu0 %1007
        %1010 = vset.pattern.permute.xlu0 3
        %1011 = vperm.xlu0 %1010, %v333
        %v1012 = vpop.permute.xlu0 %1011
        %1014 = vset.pattern.permute.xlu0 3
        %1015 = vperm.xlu0 %1014, %v334
        %v1016 = vpop.permute.xlu0 %1015
        %1018 = vset.pattern.permute.xlu0 3
        %1019 = vperm.xlu0 %1018, %v335
        %v1020 = vpop.permute.xlu0 %1019
        %v1022 = vmul.f32 %v1008, %v966
        %v1023 = vmul.f32 %v1012, %v967
        %v1024 = vmul.f32 %v1016, %v968
        %v1025 = vmul.f32 %v1020, %v969
        %v1026 = vadd.f32 %v1002, %v1022
        %v1027 = vadd.f32 %v1003, %v1023
        %v1028 = vadd.f32 %v1004, %v1024
        %v1029 = vadd.f32 %v1005, %v1025
        %1030 = vset.pattern.permute.xlu0 5
        %1031 = vperm.xlu0 %1030, %v332
        %v1032 = vpop.permute.xlu0 %1031
        %1034 = vset.pattern.permute.xlu0 5
        %1035 = vperm.xlu0 %1034, %v333
        %v1036 = vpop.permute.xlu0 %1035
        %1038 = vset.pattern.permute.xlu0 5
        %1039 = vperm.xlu0 %1038, %v334
        %v1040 = vpop.permute.xlu0 %1039
        %1042 = vset.pattern.permute.xlu0 5
        %1043 = vperm.xlu0 %1042, %v335
        %v1044 = vpop.permute.xlu0 %1043
        %v1046 = vmul.f32 %v1032, %v978
        %v1047 = vmul.f32 %v1036, %v979
        %v1048 = vmul.f32 %v1040, %v980
        %v1049 = vmul.f32 %v1044, %v981
        %v1050 = vadd.f32 %v1026, %v1046
        %v1051 = vadd.f32 %v1027, %v1047
        %v1052 = vadd.f32 %v1028, %v1048
        %v1053 = vadd.f32 %v1029, %v1049
        %s1054 = sld [smem:[#allocation2]]
        %vm1055 = vcmp.gt.f32.partialorder %v1050, 0.0
        %vm1056 = vcmp.gt.f32.partialorder %v1051, 0.0
        %vm1057 = vcmp.gt.f32.partialorder %v1052, 0.0
        %vm1058 = vcmp.gt.f32.partialorder %v1053, 0.0
        %v1059 = vstv %s1054
        %v1060 = vmul.f32 %v1059, %v1050
        %v1061 = vmul.f32 %v1059, %v1051
        %v1062 = vmul.f32 %v1059, %v1052
        %v1063 = vmul.f32 %v1059, %v1053
        %v1064 = vsel %vm1055, %v1050, %v1060
        %v1065 = vsel %vm1056, %v1051, %v1061
        %v1066 = vsel %vm1057, %v1052, %v1062
        %v1067 = vsel %vm1058, %v1053, %v1063
        %1068 = vmatprep.subr.mxu0 0.0
        %1069 = vmatpush1.msra.mxu0 1.0
        %1070 = vmatprep.subr.mxu0 0.0
        %1071 = vmatpush1.msra.mxu0 1.0
        %1072 = vmatprep.subr.mxu0 0.0
        %1073 = vmatpush1.msra.mxu0 1.0
        %1074 = vmatprep.subr.mxu0 0.0
        %1075 = vmatpush1.msra.mxu0 1.0
        %1076 = vmatprep.subr.mxu0 0.0
        %1077 = vmatpush1.msra.mxu0 1.0
        %1078 = vmatprep.subr.mxu0 0.0
        %1079 = vmatpush1.msra.mxu0 1.0
        %1080 = vmatprep.subr.mxu0 0.0
        %1081 = vmatpush1.msra.mxu0 1.0
        %1082 = vmatprep.subr.mxu0 0.0
        %1083 = vmatpush1.msra.mxu0 1.0
        %1084 = vmatprep.subr.mxu0 0.0
        %1085 = vmatpush1.msra.mxu0 1.0
        %1086 = vmatprep.subr.mxu0 0.0
        %1087 = vmatpush1.msra.mxu0 1.0
        %1088 = vmatprep.subr.mxu0 0.0
        %1089 = vmatpush1.msra.mxu0 1.0
        %1090 = vmatprep.subr.mxu0 0.0
        %1091 = vmatpush1.msra.mxu0 1.0
        %1092 = vmatprep.subr.mxu0 0.0
        %1093 = vmatpush1.msra.mxu0 1.0
        %1094 = vmatprep.subr.mxu0 0.0
        %1095 = vmatpush1.msra.mxu0 1.0
        %1096 = vmatprep.subr.mxu0 0.0
        %1097 = vmatpush1.msra.mxu0 1.0
        %1098 = vmatprep.subr.mxu0 0.0
        %1099 = vmatpush1.msra.mxu0 1.0
        %1100 = vmatprep.subr.mxu0 0.0
        %1101 = vmatpush1.msra.mxu0 0.0
        %1102 = vmatprep.subr.mxu0 0.0
        %1103 = vmatpush1.msra.mxu0 0.0
        %1104 = vmatprep.subr.mxu0 0.0
        %1105 = vmatpush1.msra.mxu0 0.0
        %1106 = vmatprep.subr.mxu0 0.0
        %1107 = vmatpush1.msra.mxu0 0.0
        %1108 = vmatprep.subr.mxu0 0.0
        %1109 = vmatpush1.msra.mxu0 0.0
        %1110 = vmatprep.subr.mxu0 0.0
        %1111 = vmatpush1.msra.mxu0 0.0
        %1112 = vmatprep.subr.mxu0 0.0
        %1113 = vmatpush1.msra.mxu0 0.0
        %1114 = vmatprep.subr.mxu0 0.0
        %1115 = vmatpush1.msra.mxu0 0.0
        %1116 = vmatprep.subr.mxu0 0.0
        %1117 = vmatpush1.msra.mxu0 0.0
        %1118 = vmatprep.subr.mxu0 0.0
        %1119 = vmatpush1.msra.mxu0 0.0
        %1120 = vmatprep.subr.mxu0 0.0
        %1121 = vmatpush1.msra.mxu0 0.0
        %1122 = vmatprep.subr.mxu0 0.0
        %1123 = vmatpush1.msra.mxu0 0.0
        %1124 = vmatprep.subr.mxu0 0.0
        %1125 = vmatpush1.msra.mxu0 0.0
        %1126 = vmatprep.subr.mxu0 0.0
        %1127 = vmatpush1.msra.mxu0 0.0
        %1128 = vmatprep.subr.mxu0 0.0
        %1129 = vmatpush1.msra.mxu0 0.0
        %1130 = vmatprep.subr.mxu0 0.0
        %1131 = vmatpush1.msra.mxu0 0.0
        %1132 = vmatprep.mubr.f32.mxu0 0.0
        %1133 = vmatmul.mubr.f32.gmra.mrb[0].mxu0 %v1064
        %v1134 = vpop.f32.mrb[0].mxu0
        %v1135 = vadd.f32 0.0, %v1134
        %v1136 = vpop.f32.mrb[0].mxu0
        %1137 = vmatprep.mubr.f32.mxu0 0.0
        %1138 = vmatmul.mubr.f32.gmra.mrb[0].mxu0 %v1065
        %v1139 = vpop.f32.mrb[0].mxu0
        %v1140 = vadd.f32 0.0, %v1139
        %v1141 = vpop.f32.mrb[0].mxu0
        %1142 = vmatprep.mubr.f32.mxu0 0.0
        %1143 = vmatmul.mubr.f32.gmra.mrb[0].mxu0 %v1066
        %v1144 = vpop.f32.mrb[0].mxu0
        %v1145 = vadd.f32 0.0, %v1144
        %v1146 = vpop.f32.mrb[0].mxu0
        %1147 = vmatprep.mubr.f32.mxu0 0.0
        %1148 = vmatmul.mubr.f32.gmra.mrb[0].mxu0 %v1067
        %v1149 = vpop.f32.mrb[0].mxu0
        %v1150 = vadd.f32 0.0, %v1149
        %v1151 = vpop.f32.mrb[0].mxu0
        %1152 = vdwg.mxu0
        %v1153 = vsel %vm415, %v1135, 0.0
        %v1154 = vsel %vm415, %v1140, 0.0
        %v1155 = vadd.f32 %v1153, %v1154
        %v1156 = vsel %vm415, %v1145, 0.0
        %v1157 = vadd.f32 %v1155, %v1156
        %v1158 = vsel %vm415, %v1150, 0.0
        %v1159 = vadd.f32 %v1157, %v1158
        %1160 = vadd.xlane.f32.xlu0 %v1159
        %v1161 = vpop.xlane.xlu0 %1160
        %v1162 = vrot.slane %v1161, 4
        %v1163 = vadd.f32 %v1161, %v1162
        %v1164 = vrot.slane %v1163, 2
        %v1165 = vadd.f32 %v1163, %v1164
        %v1166 = vrot.slane %v1165, 1
        %v1167 = vadd.f32 %v1165, %v1166
        %s1168 = vtos %v1167
        %v1169 = vmul.f32 %v1064, %v1064
        %v1170 = vmul.f32 %v1065, %v1065
        %v1171 = vmul.f32 %v1066, %v1066
        %v1172 = vmul.f32 %v1067, %v1067
        %1173 = vmatprep.subr.mxu0 0.0
        %1174 = vmatpush1.msra.mxu0 1.0
        %1175 = vmatprep.subr.mxu0 0.0
        %1176 = vmatpush1.msra.mxu0 1.0
        %1177 = vmatprep.subr.mxu0 0.0
        %1178 = vmatpush1.msra.mxu0 1.0
        %1179 = vmatprep.subr.mxu0 0.0
        %1180 = vmatpush1.msra.mxu0 1.0
        %1181 = vmatprep.subr.mxu0 0.0
        %1182 = vmatpush1.msra.mxu0 1.0
        %1183 = vmatprep.subr.mxu0 0.0
        %1184 = vmatpush1.msra.mxu0 1.0
        %1185 = vmatprep.subr.mxu0 0.0
        %1186 = vmatpush1.msra.mxu0 1.0
        %1187 = vmatprep.subr.mxu0 0.0
        %1188 = vmatpush1.msra.mxu0 1.0
        %1189 = vmatprep.subr.mxu0 0.0
        %1190 = vmatpush1.msra.mxu0 1.0
        %1191 = vmatprep.subr.mxu0 0.0
        %1192 = vmatpush1.msra.mxu0 1.0
        %1193 = vmatprep.subr.mxu0 0.0
        %1194 = vmatpush1.msra.mxu0 1.0
        %1195 = vmatprep.subr.mxu0 0.0
        %1196 = vmatpush1.msra.mxu0 1.0
        %1197 = vmatprep.subr.mxu0 0.0
        %1198 = vmatpush1.msra.mxu0 1.0
        %1199 = vmatprep.subr.mxu0 0.0
        %1200 = vmatpush1.msra.mxu0 1.0
        %1201 = vmatprep.subr.mxu0 0.0
        %1202 = vmatpush1.msra.mxu0 1.0
        %1203 = vmatprep.subr.mxu0 0.0
        %1204 = vmatpush1.msra.mxu0 1.0
        %1205 = vmatprep.subr.mxu0 0.0
        %1206 = vmatpush1.msra.mxu0 0.0
        %1207 = vmatprep.subr.mxu0 0.0
        %1208 = vmatpush1.msra.mxu0 0.0
        %1209 = vmatprep.subr.mxu0 0.0
        %1210 = vmatpush1.msra.mxu0 0.0
        %1211 = vmatprep.subr.mxu0 0.0
        %1212 = vmatpush1.msra.mxu0 0.0
        %1213 = vmatprep.subr.mxu0 0.0
        %1214 = vmatpush1.msra.mxu0 0.0
        %1215 = vmatprep.subr.mxu0 0.0
        %1216 = vmatpush1.msra.mxu0 0.0
        %1217 = vmatprep.subr.mxu0 0.0
        %1218 = vmatpush1.msra.mxu0 0.0
        %1219 = vmatprep.subr.mxu0 0.0
        %1220 = vmatpush1.msra.mxu0 0.0
        %1221 = vmatprep.subr.mxu0 0.0
        %1222 = vmatpush1.msra.mxu0 0.0
        %1223 = vmatprep.subr.mxu0 0.0
        %1224 = vmatpush1.msra.mxu0 0.0
        %1225 = vmatprep.subr.mxu0 0.0
        %1226 = vmatpush1.msra.mxu0 0.0
        %1227 = vmatprep.subr.mxu0 0.0
        %1228 = vmatpush1.msra.mxu0 0.0
        %1229 = vmatprep.subr.mxu0 0.0
        %1230 = vmatpush1.msra.mxu0 0.0
        %1231 = vmatprep.subr.mxu0 0.0
        %1232 = vmatpush1.msra.mxu0 0.0
        %1233 = vmatprep.subr.mxu0 0.0
        %1234 = vmatpush1.msra.mxu0 0.0
        %1235 = vmatprep.subr.mxu0 0.0
        %1236 = vmatpush1.msra.mxu0 0.0
        %1237 = vmatprep.mubr.f32.mxu0 0.0
        %1238 = vmatmul.mubr.f32.gmra.mrb[0].mxu0 %v1169
        %v1239 = vpop.f32.mrb[0].mxu0
        %v1240 = vadd.f32 0.0, %v1239
        %v1241 = vpop.f32.mrb[0].mxu0
        %1242 = vmatprep.mubr.f32.mxu0 0.0
        %1243 = vmatmul.mubr.f32.gmra.mrb[0].mxu0 %v1170
        %v1244 = vpop.f32.mrb[0].mxu0
        %v1245 = vadd.f32 0.0, %v1244
        %v1246 = vpop.f32.mrb[0].mxu0
        %1247 = vmatprep.mubr.f32.mxu0 0.0
        %1248 = vmatmul.mubr.f32.gmra.mrb[0].mxu0 %v1171
        %v1249 = vpop.f32.mrb[0].mxu0
        %v1250 = vadd.f32 0.0, %v1249
        %v1251 = vpop.f32.mrb[0].mxu0
        %1252 = vmatprep.mubr.f32.mxu0 0.0
        %1253 = vmatmul.mubr.f32.gmra.mrb[0].mxu0 %v1172
        %v1254 = vpop.f32.mrb[0].mxu0
        %v1255 = vadd.f32 0.0, %v1254
        %v1256 = vpop.f32.mrb[0].mxu0
        %1257 = vdwg.mxu0
        %v1258 = vsel %vm415, %v1240, 0.0
        %v1259 = vsel %vm415, %v1245, 0.0
        %v1260 = vadd.f32 %v1258, %v1259
        %v1261 = vsel %vm415, %v1250, 0.0
        %v1262 = vadd.f32 %v1260, %v1261
        %v1263 = vsel %vm415, %v1255, 0.0
        %v1264 = vadd.f32 %v1262, %v1263
        %1265 = vadd.xlane.f32.xlu0 %v1264
        %v1266 = vpop.xlane.xlu0 %1265
        %v1267 = vrot.slane %v1266, 4
        %v1268 = vadd.f32 %v1266, %v1267
        %v1269 = vrot.slane %v1268, 2
        %v1270 = vadd.f32 %v1268, %v1269
        %v1271 = vrot.slane %v1270, 1
        %v1272 = vadd.f32 %v1270, %v1271
        %s1273 = vtos %v1272
        %s1274 = smul.f32 %s1168, 0.00024414063
        %s1275 = smul.f32 %s1273, 0.00024414063
        %s1276 = smul.f32 %s1274, %s1274
        %s1277 = ssub.f32 %s1275, %s1276
        %s1278 = smax.f32 %s1277, 0.0
        %s1279 = sadd.f32 %s1278, 1e-08
        %v1280 = vstv %s1279
        %v1281 = vrsqrt.pop %v1280
        %s1282 = vtos %v1281
        %v1283 = vld [vmem:[#allocation8] sm:$0xf]
        %v1284 = vld [vmem:[#allocation8 + $0x4] sm:$0xf]
        %v1285 = vpack.c.bf16 %v1065, %v1064
        %v1286 = vpack.c.bf16 %v1067, %v1066
        %v1289 = vunpack.c.l.b16 %v1283
        %v1290 = vunpack.c.l.b16 %v1284
        %v1291 = vpack.c.b16 %v1290, %v1289
        %vm1292 = vcmask 261120
        %v1294 = vsel %vm1292, %v1291, 0
        %1296 = vmatprep.subr.bf16.mxu0 0
        %1297 = vmatpush1.bf16.msra.mxu0 %v1285
        %1298 = vmatprep.subr.bf16.mxu0 0
        %1299 = vmatpush1.bf16.msra.mxu0 %v1286
        %1300 = vmatprep.subr.bf16.mxu0 0
        %1301 = vmatpush1.bf16.msra.mxu0 0
        %1302 = vmatprep.subr.bf16.mxu0 0
        %1303 = vmatpush1.bf16.msra.mxu0 0
        %1304 = vmatprep.subr.bf16.mxu0 0
        %1305 = vmatpush1.bf16.msra.mxu0 0
        %1306 = vmatprep.subr.bf16.mxu0 0
        %1307 = vmatpush1.bf16.msra.mxu0 0
        %1308 = vmatprep.subr.bf16.mxu0 0
        %1309 = vmatpush1.bf16.msra.mxu0 0
        %1310 = vmatprep.subr.bf16.mxu0 0
        %1311 = vmatpush1.bf16.msra.mxu0 0
        %1312 = vmatprep.subr.bf16.mxu0 0
        %1313 = vmatpush1.bf16.msra.mxu0 0
        %1314 = vmatprep.subr.bf16.mxu0 0
        %1315 = vmatpush1.bf16.msra.mxu0 0
        %1316 = vmatprep.subr.bf16.mxu0 0
        %1317 = vmatpush1.bf16.msra.mxu0 0
        %1318 = vmatprep.subr.bf16.mxu0 0
        %1319 = vmatpush1.bf16.msra.mxu0 0
        %1320 = vmatprep.subr.bf16.mxu0 0
        %1321 = vmatpush1.bf16.msra.mxu0 0
        %1322 = vmatprep.subr.bf16.mxu0 0
        %1323 = vmatpush1.bf16.msra.mxu0 0
        %1324 = vmatprep.subr.bf16.mxu0 0
        %1325 = vmatpush1.bf16.msra.mxu0 0
        %1326 = vmatprep.subr.bf16.mxu0 0
        %1327 = vmatpush1.bf16.msra.mxu0 0
        %1328 = vmatprep.mubr.bf16.mxu0 0
        %1329 = vmatmul.mubr.bf16.gmra.mrb[0].mxu0 %v1294
        %v1330 = vpop.f32.mrb[0].mxu0
        %v1331 = vadd.f32 0.0, %v1330
        %v1332 = vpop.f32.mrb[0].mxu0
        %v1333 = vpop.f32.mrb[0].mxu0
        %v1334 = vadd.f32 0.0, %v1333
        %v1335 = vpop.f32.mrb[0].mxu0
        %1336 = vdwg.mxu0
        %v1337 = vstv %s1282
        %v1338 = vmul.f32 %v1331, %v1337
        %v1339 = vmul.f32 %v1334, %v1337
        %s1340 = smul.f32 %s1274, %s1282
        %v1341 = vstv %s1340
        %v1342 = vmul.f32 %v336, %v1341
        %v1343 = vmul.f32 %v337, %v1341
        %1346 = vrot.lane.b32.xlu0 %v1342, 127
        %v1347 = vpop.permute.xlu0 %1346
        %1348 = vrot.lane.b32.xlu0 %v1343, 127
        %v1349 = vpop.permute.xlu0 %1348
        %v1352 = vsub.f32 %v336, %v1347
        %v1353 = vsub.f32 %v337, %v1349
        %1355 = vset.pattern.permute.xlu0 0
        %1356 = vperm.xlu0 %1355, %v1352
        %v1357 = vpop.permute.xlu0 %1356
        %1360 = vset.pattern.permute.xlu0 0
        %1361 = vperm.xlu0 %1360, %v1353
        %v1362 = vpop.permute.xlu0 %1361
        %v1364 = vadd.f32 %v1338, %v1357
        %v1365 = vadd.f32 %v1339, %v1362
        %v1366 = vadd.f32 %v1364, %v330
        %v1367 = vadd.f32 %v1365, %v331
        %1368 = vst [vmem:[%s328] sm:$0xff] %v1366
        %1369 = vst [vmem:[%s328 + $0x8] sm:$0xff] %v1367
        %s1370 = sand.u32 %s165, 1
        %s1371 = scalar_lea.sflag [#allocation5], %s1370
        %s1372 = sand.u32 %s165, 1
        %s1373 = smul.addr %s1372, 16
        %s1374 = scalar_lea.vmem [#allocation12], %s1373
        // Predicated region
        $region65: #{tpu_custom_call.1} parent=43 // pred_check
          %p1375 = pneg %p175
        $region66: #{tpu_custom_call.1} parent=43 // pred_check_branch
          %1377 = sbr.rel (%p1375) target = $region68
        $region67: #{tpu_custom_call.1} parent=43 // pred_region
          %s1379 = ssub.s32 256, 256
          %1380 = vsyncadd %s1371, %s1379
          %s1381 = smul.addr %s26, 2
          %s1382 = smul.addr %s1381, 128
          %s1383 = scalar_lea.hbm %s6, %s1382
          %s1384 = sshll.u32 %s1374, 4
          %s1385 = int_to_ptr.vmem [resolvable:$true] %s1384
          %1390 = dma.vmem_to_hbm [thread:$0]  %s1385, 256, %s1383, %s1371, 128, 128, 8
        $region68: #{tpu_custom_call.1} parent=43 // pred_fallthru
          _
      $region44: #{tpu_custom_call.1} parent=5 // pred_fallthru
        _
      %p1391 = scmp.le.s32.totalorder 2, %s21
      // Predicated region
      $region69: #{tpu_custom_call.1} parent=5 // pred_check
        %p1392 = pneg %p1391
      $region70: #{tpu_custom_call.1} parent=5 // pred_check_branch
        %1394 = sbr.rel (%p1392) target = $region72
      $region71: #{tpu_custom_call.1} parent=5 // pred_region
        %s1395 = ssub.s32 %s21, 2
        // Predicated region
        $region73: #{tpu_custom_call.1} parent=71 // pred_check
          %p1396 = pneg %p181
        $region74: #{tpu_custom_call.1} parent=71 // pred_check_branch
          %1398 = sbr.rel (%p1396) target = $region76
        $region75: #{tpu_custom_call.1} parent=71 // pred_region
          %s1399 = sand.u32 %s166, 1
          %s1400 = scalar_lea.sflag [#allocation5], %s1399
          %s1401 = sand.u32 %s166, 1
          %s1402 = smul.addr %s1401, 16
          %s1403 = scalar_lea.vmem [#allocation12], %s1402
          %1404 = dma.done %s1400, 256
        $region76: #{tpu_custom_call.1} parent=71 // pred_fallthru
          _
      $region72: #{tpu_custom_call.1} parent=5 // pred_fallthru
        _
    $region6: #{tpu_custom_call.1} parent=1 // loop_footer
      %s25 = sadd.s32 1, %s21
    $region7: #{tpu_custom_call.1} parent=1 // loop_footer_branch
      %20 = sbr.rel target = $region3
    $region8: #{tpu_custom_call.1} parent=1 // loop_exit
      _
    %1405 = vsyncpa [#allocation4], 1
    %s1406 = scalar_lea.sflag [#allocation4], 1
    %1407 = vsyncpa %s1406, 1
    %1408 = vsyncpa [#allocation7], 1
    %1409 = vsyncpa [#allocation10], 1
    %1410 = vsyncpa [#allocation5], 1
    %s1411 = scalar_lea.sflag [#allocation5], 1
    %1412 = vsyncpa %s1411, 1

</llo_original>
